<compile_context>
chip_gen: v7x
topology: tpu7x:2x2x1
jax: 0.10.0
libtpu: 0.0.40
codegen_flags: <defaults>
</compile_context>

<pallas_src>
import functools

import numpy as np
import jax
import jax.numpy as jnp
from jax.experimental import pallas as pl
from jax.experimental.pallas import tpu as pltpu


def _round_up(x, m):
    return -(-x // m) * m


def _cdiv(a, b):
    return -(-a // b)


# --------------------------------------------------------------------------- #
# Pallas kernel                                                                #
# --------------------------------------------------------------------------- #
def _cfm_slab_kernel(sgx_re_ref, sgx_im_ref, sgy_re_ref, sgy_im_ref,
                     fx_ref, fy_ref, out_ref, acc_ref,
                     *, out_pad, v_total, need_mask):
    """V-gridded reduction + fused Gram epilogue.

    Per grid step (reduction over V):
        acc[0] += sgx_re @ fx     acc[1] += sgx_im @ fx      (F_hat = A, re/im)
        acc[2] += sgy_re @ fy     acc[3] += sgy_im @ fy      (G_hat = B, re/im)
    Last step writes the lane-dense slab [AAt_re | AAt_im | BAt_re | BAt_im].
    """
    step = pl.program_id(0)

    @pl.when(step == 0)
    def _():
        acc_ref[...] = jnp.zeros_like(acc_ref)

    sgx_re = sgx_re_ref[...]
    sgx_im = sgx_im_ref[...]
    sgy_re = sgy_re_ref[...]
    sgy_im = sgy_im_ref[...]
    fx = fx_ref[...]
    fy = fy_ref[...]

    if need_mask:
        # Tail tile: zero BOTH operands past V so the (unspecified) out-of-bounds
        # block contents can never reach the MXU.  Replaces the wrapper-side
        # jnp.pad HBM pass; a few VPU selects, hidden under the DMA.
        k_dim, tv = sgx_re.shape
        c_dim = fx.shape[1]
        rem = v_total - step * tv
        col_ok = jax.lax.broadcasted_iota(jnp.int32, (k_dim, tv), 1) < rem
        row_ok = jax.lax.broadcasted_iota(jnp.int32, (tv, c_dim), 0) < rem
        zs = jnp.zeros((), sgx_re.dtype)
        zf = jnp.zeros((), fx.dtype)
        sgx_re = jnp.where(col_ok, sgx_re, zs)
        sgx_im = jnp.where(col_ok, sgx_im, zs)
        sgy_re = jnp.where(col_ok, sgy_re, zs)
        sgy_im = jnp.where(col_ok, sgy_im, zs)
        fx = jnp.where(row_ok, fx, zf)
        fy = jnp.where(row_ok, fy, zf)

    # Four small MXU calls per step — no per-step concatenate, no dead cross-blocks.
    acc_ref[0] = acc_ref[0] + jnp.dot(sgx_re, fx, preferred_element_type=jnp.float32)
    acc_ref[1] = acc_ref[1] + jnp.dot(sgx_im, fx, preferred_element_type=jnp.float32)
    acc_ref[2] = acc_ref[2] + jnp.dot(sgy_re, fy, preferred_element_type=jnp.float32)
    acc_ref[3] = acc_ref[3] + jnp.dot(sgy_im, fy, preferred_element_type=jnp.float32)

    @pl.when(step == pl.num_programs(0) - 1)
    def _():
        f_re, f_im = acc_ref[0], acc_ref[1]            # F_hat = A
        g_re, g_im = acc_ref[2], acc_ref[3]            # G_hat = B
        k_dim = f_re.shape[0]

        def gram(a, b):                                # a @ b^T, f32 accumulation
            return jax.lax.dot_general(a, b, (((1,), (1,)), ((), ())),
                                       preferred_element_type=jnp.float32)

        # A @ conj(A)^T and B @ conj(A)^T from 8 tiny (K,C)x(C,K) MXU calls.
        aat_re = gram(f_re, f_re) + gram(f_im, f_im)
        aat_im = gram(f_im, f_re) - gram(f_re, f_im)
        bat_re = gram(g_re, f_re) + gram(g_im, f_im)
        bat_im = gram(g_im, f_re) - gram(g_re, f_im)

        slab = jnp.concatenate([aat_re, aat_im, bat_re, bat_im], axis=1)
        if out_pad > 4 * k_dim:
            slab = jnp.concatenate(
                [slab, jnp.zeros((k_dim, out_pad - 4 * k_dim), jnp.float32)], axis=1)
        out_ref[...] = slab                            # single lane-dense store


# --------------------------------------------------------------------------- #
# Wrapper helpers                                                              #
# --------------------------------------------------------------------------- #
def _vmem_capacity_bytes():
    try:
        return int(pltpu.get_tpu_info().vmem_capacity_bytes)
    except Exception:
        return 128 << 20            # v5e/v6e default; v7x reports 64 MiB when queryable


def _choose_tile_v(v_dim, k_dim, c_dim, itemsize, vmem_cap, requested=None):
    per_v = (4 * k_dim + 2 * c_dim) * itemsize       # input bytes per vertex (6 planes)
    budget = max(vmem_cap - (16 << 20), 8 << 20)     # headroom: acc, out slab, Mosaic scratch
    tv_max = max(budget // (2 * per_v), 128)         # 2x = double-buffered input tiles
    if requested is None:
        # >= 2048 and >= ~4 MiB of input traffic per grid step: amortizes the
        # ~0.35 us fixed per-step overhead (the biggest wall-clock lever here).
        tv = max(2048, (4 << 20) // per_v)
    else:
        tv = int(requested)
    tv = int(min(tv, tv_max, 1 << 16))
    tv = max((tv // 128) * 128, 128)                 # lane-aligned tile
    if v_dim <= tv:
        return v_dim                                 # single step; full-dim block is legal
    return tv


def _resolvent_mask(evals_x, evals_y, gamma):
    # TODO(synk): get_mask() is external to the provided module; this is the
    # standard resolvent-regularizer mask (rows = evals_y, cols = evals_x).
    evx = jnp.maximum(evals_x, 0.0)                  # clamp: (-eps)**gamma would be NaN
    evy = jnp.maximum(evals_y, 0.0)
    scale = jnp.maximum(jnp.maximum(jnp.max(evx), jnp.max(evy)), jnp.float32(1e-12))
    exg = jnp.power(evx / scale, gamma)[None, :]     # (1, K)
    eyg = jnp.power(evy / scale, gamma)[:, None]     # (K, 1)
    m_re = eyg / (eyg * eyg + 1.0) - exg / (exg * exg + 1.0)
    m_im = 1.0 / (eyg * eyg + 1.0) - 1.0 / (exg * exg + 1.0)
    return m_re * m_re + m_im * m_im                 # (K, K)


def _solve_complex(m_re, m_im, r_re, r_im):
    """Solve (m_re + i m_im) x = (r_re + i r_im) via the equivalent real system."""
    top = jnp.concatenate([m_re, -m_im], axis=-1)
    bot = jnp.concatenate([m_im, m_re], axis=-1)
    big = jnp.concatenate([top, bot], axis=-2)
    rhs = jnp.concatenate([r_re, r_im], axis=-2)
    sol = jnp.linalg.solve(big, rhs)
    n = m_re.shape[-1]
    return sol[..., :n, :], sol[..., n:, :]


def _split_complex(x):
    """Accept complex arrays OR pre-split (re, im) planes (preferred: avoids an
    un-hidden complex de-interleave HBM pass in front of the kernel)."""
    if isinstance(x, (tuple, list)):
        return jnp.asarray(x[0]), jnp.asarray(x[1])
    x = jnp.asarray(x)
    if jnp.issubdtype(x.dtype, jnp.complexfloating):
        return jnp.real(x), jnp.imag(x)
    return x, jnp.zeros_like(x)


def _strip_batch_feat(f):
    f = jnp.asarray(f)
    if jnp.issubdtype(f.dtype, jnp.complexfloating):
        f = jnp.real(f)           # torch casts *real* descriptors to complex; imag == 0
    if f.ndim == 3:
        f = f[0]
    return f


# --------------------------------------------------------------------------- #
# Public entry point                                                           #
# --------------------------------------------------------------------------- #
def regularized_cfm_net(feat_x, feat_y, spec_grad_x, spec_grad_y,
                        cevals_x, cevals_y,
                        lambda_=0.001, resolvant_gamma=0.5, *, tile_v=None):
    """JAX/Pallas equivalent of RegularizedCFMNet.forward -> (1, K, K) complex64.

    The matmuls run in bf16 iff *all* matmul inputs already arrive as bf16;
    a wrapper-side cast would cost more HBM bytes than it saves, so none is done.
    """
    fx = _strip_batch_feat(feat_x)
    fy = _strip_batch_feat(feat_y)
    sgx_re, sgx_im = _split_complex(spec_grad_x)
    sgy_re, sgy_im = _split_complex(spec_grad_y)

    planes = [sgx_re, sgx_im, sgy_re, sgy_im, fx, fy]
    mm_dtype = (jnp.bfloat16 if all(p.dtype == jnp.bfloat16 for p in planes)
                else jnp.float32)
    planes = [p.astype(mm_dtype) for p in planes]     # no-op when dtypes already match
    sgx_re, sgx_im, sgy_re, sgy_im, fx, fy = planes
    itemsize = 2 if mm_dtype == jnp.bfloat16 else 4

    k_dim, v_dim = sgx_re.shape
    c_dim = fx.shape[-1]
    assert fx.shape[0] == v_dim and fy.shape == fx.shape
    assert sgx_im.shape == (k_dim, v_dim) and sgy_re.shape == (k_dim, v_dim)

    vmem_cap = _vmem_capacity_bytes()
    tv = _choose_tile_v(v_dim, k_dim, c_dim, itemsize, vmem_cap, tile_v)
    n_steps = _cdiv(v_dim, tv)
    out_pad = max(_round_up(4 * k_dim, 128), 128)     # lane-dense packed output slab

    # Real double-buffer VMEM formula (2 buffers x 6 input tiles) + accumulator
    # + output slab + Mosaic-internal headroom, capped below physical VMEM.
    inputs_bytes = 2 * tv * (4 * k_dim + 2 * c_dim) * itemsize
    fixed_bytes = 4 * k_dim * c_dim * 4 + 2 * k_dim * out_pad * 4
    vmem_limit = int(min(max(inputs_bytes + fixed_bytes + (8 << 20), 32 << 20),
                         vmem_cap - (8 << 20)))

    sg_spec = pl.BlockSpec((k_dim, tv), lambda v: (0, v))
    ft_spec = pl.BlockSpec((tv, c_dim), lambda v: (v, 0))
    # NOTE: if a profile shows exposed DMA at step boundaries, add
    #       pipeline_mode=pl.Buffered(3) to sg_spec/ft_spec (re-check VMEM on v7x).
    # TODO(synk): on v7x the second TensorCore stays idle; splitting V over a leading
    #             "parallel" axis needs per-core partial outputs + a de-fused Gram
    #             epilogue (or pre-stacked inputs), left out to keep the fused path.

    kernel = functools.partial(_cfm_slab_kernel, out_pad=out_pad, v_total=v_dim,
                               need_mask=(v_dim % tv != 0))
    slab = pl.pallas_call(
        kernel,
        out_shape=jax.ShapeDtypeStruct((k_dim, out_pad), jnp.float32),
        grid=(n_steps,),
        in_specs=[sg_spec, sg_spec, sg_spec, sg_spec, ft_spec, ft_spec],
        out_specs=pl.BlockSpec((k_dim, out_pad), lambda v: (0, 0)),
        scratch_shapes=[pltpu.VMEM((4, k_dim, c_dim), jnp.float32)],
        compiler_params=pltpu.CompilerParams(
            dimension_semantics=("arbitrary",),        # V is a reduction axis
            vmem_limit_bytes=vmem_limit),
        cost_estimate=pl.CostEstimate(
            flops=2 * 4 * k_dim * v_dim * c_dim + 8 * 2 * k_dim * k_dim * c_dim,
            transcendentals=0,
            bytes_accessed=itemsize * (4 * k_dim + 2 * c_dim) * v_dim
                           + 4 * k_dim * out_pad),
    )(sgx_re, sgx_im, sgy_re, sgy_im, fx, fy)

    aat_re = slab[:, 0 * k_dim:1 * k_dim]
    aat_im = slab[:, 1 * k_dim:2 * k_dim]
    bat_re = slab[:, 2 * k_dim:3 * k_dim]
    bat_im = slab[:, 3 * k_dim:4 * k_dim]

    if lambda_ == 0:
        # Q = B @ pinv(A) = B_A_t @ A_A_t^{-1} for full-row-rank A (K <= C).
        # AAt is Hermitian -> solve AAt @ Y = BAt^H, then Q = Y^H.
        # TODO(synk): torch.pinverse (complex SVD) also handles rank-deficient A;
        #             no TPU-friendly equivalent, full-row-rank assumed here.
        y_re, y_im = _solve_complex(aat_re, aat_im, bat_re.T, -bat_im.T)
        q_re, q_im = y_re.T, -y_im.T
        return (q_re + 1j * q_im).astype(jnp.complex64)[None]

    evx = jnp.asarray(cevals_x)
    evy = jnp.asarray(cevals_y)
    if jnp.issubdtype(evx.dtype, jnp.complexfloating):
        evx = jnp.real(evx)
    if jnp.issubdtype(evy.dtype, jnp.complexfloating):
        evy = jnp.real(evy)
    d_mask = _resolvent_mask(evx.astype(jnp.float32).reshape(-1),
                             evy.astype(jnp.float32).reshape(-1), resolvant_gamma)

    # Per-spectral-row regularized solve (matches the torch loop):
    #   Q[i, :] = conj( (A_A_t + lambda * diag(D[i, :]))^{-1} conj(B_A_t[i, :]) )
    # TODO(synk): torch.inverse (complex) has no Pallas equivalent; the K tiny
    #             2Kx2K augmented real solves run in plain JAX (f32; cast to f64
    #             with x64 enabled if a tighter tolerance is required downstream).
    lhs_re = aat_re[None, :, :] + lambda_ * jax.vmap(jnp.diag)(d_mask)    # (K, K, K)
    lhs_im = jnp.broadcast_to(aat_im[None, :, :], (k_dim, k_dim, k_dim))
    rhs_re = bat_re[:, :, None]                                           # conj(BAt[i]) re
    rhs_im = -bat_im[:, :, None]                                          # conj(BAt[i]) im
    x_re, x_im = _solve_complex(lhs_re, lhs_im, rhs_re, rhs_im)
    q = (x_re[..., 0] - 1j * x_im[..., 0]).astype(jnp.complex64)          # conj(solution)
    return q[None]                                                        # (1, K, K)


# --------------------------------------------------------------------------- #
# float64 numpy reference (sanity check of the same math)                      #
# --------------------------------------------------------------------------- #
def _reference_numpy(feat_x, feat_y, sgx, sgy, evx, evy, lambda_, gamma):
    fx = np.asarray(feat_x, np.complex128)[0]
    fy = np.asarray(feat_y, np.complex128)[0]
    A = np.asarray(sgx, np.complex128) @ fx
    B = np.asarray(sgy, np.complex128) @ fy
    if lambda_ == 0:
        return (B @ np.linalg.pinv(A))[None]
    evx = np.asarray(evx, np.float64)
    evy = np.asarray(evy, np.float64)
    scale = max(evx.max(), evy.max())
    exg = (evx / scale) ** gamma
    eyg = (evy / scale) ** gamma
    m_re = eyg[:, None] / (eyg[:, None] ** 2 + 1) - exg[None, :] / (exg[None, :] ** 2 + 1)
    m_im = 1.0 / (eyg[:, None] ** 2 + 1) - 1.0 / (exg[None, :] ** 2 + 1)
    D = m_re ** 2 + m_im ** 2
    AAt = A @ A.conj().T
    BAt = B @ A.conj().T
    K = A.shape[0]
    rows = []
    for i in range(K):
        sol = np.linalg.solve(AAt + lambda_ * np.diag(D[i]), np.conj(BAt[i])[:, None])
        rows.append(np.conj(sol[:, 0]))
    return np.stack(rows, axis=0)[None]


if __name__ == "__main__":
    # Small shapes; V=200 with tile_v=128 exercises the gridded accumulator path
    # (2 V-steps) plus the in-kernel tail-masking branch.
    K, V, C = 16, 200, 32
    key = jax.random.PRNGKey(0)
    k1, k2, k3, k4, k5, k6 = jax.random.split(key, 6)

    feat_x = jax.random.normal(k1, (1, V, C), jnp.float32)
    feat_y = jax.random.normal(k2, (1, V, C), jnp.float32)
    sgx_re = jax.random.normal(k3, (K, V), jnp.float32)
    sgx_im = jax.random.normal(k4, (K, V), jnp.float32)
    sgy_re = jax.random.normal(k5, (K, V), jnp.float32)
    sgy_im = jax.random.normal(k6, (K, V), jnp.float32)
    cevals_x = jnp.linspace(0.0, 5.0, K, dtype=jnp.float32)
    cevals_y = jnp.linspace(0.0, 6.0, K, dtype=jnp.float32)

    sgx64 = np.asarray(sgx_re, np.float64) + 1j * np.asarray(sgx_im, np.float64)
    sgy64 = np.asarray(sgy_re, np.float64) + 1j * np.asarray(sgy_im, np.float64)
    q_ref = _reference_numpy(feat_x, feat_y, sgx64, sgy64, cevals_x, cevals_y, 0.001, 0.5)
    ref_scale = np.max(np.abs(q_ref))

    def check(q, tol):
        q = np.asarray(jax.block_until_ready(q))
        assert q.shape == (1, K, K)
        assert np.all(np.isfinite(q.real)) and np.all(np.isfinite(q.imag))
        err = np.max(np.abs(q - q_ref))
        assert err <= tol * ref_scale + 1e-4, f"mismatch: max|diff|={err}, scale={ref_scale}"

    # 1) auto tile_v (single V step for this small V)
    q1 = regularized_cfm_net(feat_x, feat_y, (sgx_re, sgx_im), (sgy_re, sgy_im),
                             cevals_x, cevals_y, lambda_=0.001, resolvant_gamma=0.5)
    check(q1, 5e-2)

    # 2) forced small tile -> gridded reduction + in-kernel tail masking (200 = 128+72)
    q2 = regularized_cfm_net(feat_x, feat_y, (sgx_re, sgx_im), (sgy_re, sgy_im),
                             cevals_x, cevals_y, lambda_=0.001, resolvant_gamma=0.5,
                             tile_v=128)
    check(q2, 5e-2)

    # 3) bf16 fast path: inputs ALREADY bf16 (no wrapper cast pass); looser tolerance.
    bf = lambda a: a.astype(jnp.bfloat16)
    q3 = regularized_cfm_net(bf(feat_x), bf(feat_y), (bf(sgx_re), bf(sgx_im)),
                             (bf(sgy_re), bf(sgy_im)), cevals_x, cevals_y,
                             lambda_=0.001, resolvant_gamma=0.5)
    check(q3, 5e-1)

    # 4) lambda_ == 0 path (B @ pinv(A) via the Gram solve, full-row-rank A).
    q0 = regularized_cfm_net(feat_x, feat_y, (sgx_re, sgx_im), (sgy_re, sgy_im),
                             cevals_x, cevals_y, lambda_=0.0, resolvant_gamma=0.5)
    q0 = np.asarray(jax.block_until_ready(q0))
    q0_ref = _reference_numpy(feat_x, feat_y, sgx64, sgy64, cevals_x, cevals_y, 0.0, 0.5)
    scale0 = np.max(np.abs(q0_ref))
    assert q0.shape == (1, K, K)
    assert np.all(np.isfinite(q0.real)) and np.all(np.isfinite(q0.imag))
    err0 = np.max(np.abs(q0 - q0_ref))
    assert err0 <= 5e-2 * scale0 + 1e-4, f"lambda=0 mismatch: {err0} vs scale {scale0}"

    print("KERNEL_OK")
</pallas_src>

<mosaic_0001>
module attributes {stable_mosaic.version = 11 : i64} {
  func.func @_cfm_slab_kernel(%arg0: i32, %arg1: memref<16x200xf32, #tpu.memory_space<vmem>>, %arg2: memref<16x200xf32, #tpu.memory_space<vmem>>, %arg3: memref<16x200xf32, #tpu.memory_space<vmem>>, %arg4: memref<16x200xf32, #tpu.memory_space<vmem>>, %arg5: memref<200x32xf32, #tpu.memory_space<vmem>>, %arg6: memref<200x32xf32, #tpu.memory_space<vmem>>, %arg7: memref<16x128xf32, #tpu.memory_space<vmem>>, %arg8: memref<4x16x32xf32, #tpu.memory_space<vmem>>) attributes {dimension_semantics = [#tpu.dimension_semantics<arbitrary>], iteration_bounds = array<i64: 1>, scalar_prefetch = 0 : i64, scratch_operands = 1 : i64, tpu.core_type = #tpu.core_type<tc>, window_params = [{transform_indices = @transform_0, window_bounds = array<i64: 16, 200>}, {transform_indices = @transform_1, window_bounds = array<i64: 16, 200>}, {transform_indices = @transform_2, window_bounds = array<i64: 16, 200>}, {transform_indices = @transform_3, window_bounds = array<i64: 16, 200>}, {transform_indices = @transform_4, window_bounds = array<i64: 200, 32>}, {transform_indices = @transform_5, window_bounds = array<i64: 200, 32>}, {pipeline_mode = #tpu.pipeline_mode<synchronous>, transform_indices = @transform_6, window_bounds = array<i64: 16, 128>}]} {
    %c0_i32 = arith.constant 0 : i32
    %0 = arith.cmpi eq, %arg0, %c0_i32 : i32
    %1 = arith.extui %0 : i1 to i32
    %c0_i32_0 = arith.constant 0 : i32
    %2 = arith.cmpi ne, %1, %c0_i32_0 : i32
    scf.if %2 {
      %cst_38 = arith.constant 0.000000e+00 : f32
      %40 = vector.broadcast %cst_38 : f32 to vector<4x16x32xf32>
      %c0_39 = arith.constant 0 : index
      %c0_40 = arith.constant 0 : index
      %c0_41 = arith.constant 0 : index
      %41 = vector.load %arg8[%c0_39, %c0_40, %c0_41] : memref<4x16x32xf32, #tpu.memory_space<vmem>>, vector<4x16x32xf32>
      tpu.vector_store %arg8[%c0_39, %c0_40, %c0_41], %40 {strides = array<i32>} : memref<4x16x32xf32, #tpu.memory_space<vmem>>, vector<4x16x32xf32>,
    } else {
    }
    %c0 = arith.constant 0 : index
    %c0_1 = arith.constant 0 : index
    %3 = vector.load %arg1[%c0, %c0_1] : memref<16x200xf32, #tpu.memory_space<vmem>>, vector<16x200xf32>
    %c0_2 = arith.constant 0 : index
    %c0_3 = arith.constant 0 : index
    %4 = vector.load %arg2[%c0_2, %c0_3] : memref<16x200xf32, #tpu.memory_space<vmem>>, vector<16x200xf32>
    %c0_4 = arith.constant 0 : index
    %c0_5 = arith.constant 0 : index
    %5 = vector.load %arg3[%c0_4, %c0_5] : memref<16x200xf32, #tpu.memory_space<vmem>>, vector<16x200xf32>
    %c0_6 = arith.constant 0 : index
    %c0_7 = arith.constant 0 : index
    %6 = vector.load %arg4[%c0_6, %c0_7] : memref<16x200xf32, #tpu.memory_space<vmem>>, vector<16x200xf32>
    %c0_8 = arith.constant 0 : index
    %c0_9 = arith.constant 0 : index
    %7 = vector.load %arg5[%c0_8, %c0_9] : memref<200x32xf32, #tpu.memory_space<vmem>>, vector<200x32xf32>
    %c0_10 = arith.constant 0 : index
    %c0_11 = arith.constant 0 : index
    %8 = vector.load %arg6[%c0_10, %c0_11] : memref<200x32xf32, #tpu.memory_space<vmem>>, vector<200x32xf32>
    %c0_12 = arith.constant 0 : index
    %c0_13 = arith.constant 0 : index
    %c0_14 = arith.constant 0 : index
    %9 = vector.load %arg8[%c0_12, %c0_13, %c0_14] : memref<4x16x32xf32, #tpu.memory_space<vmem>>, vector<1x16x32xf32>
    %10 = vector.shape_cast %9 : vector<1x16x32xf32> to vector<16x32xf32>
    %cst = arith.constant dense<0.000000e+00> : vector<16x32xf32>
    %11 = tpu.matmul %3, %7, %cst {dimension_numbers = #tpu.dot_dimension_numbers<[1], [0], [0], [1], [0, 0, 1, 1], [], []>} : vector<16x200xf32>, vector<200x32xf32>, vector<16x32xf32> -> vector<16x32xf32>
    %12 = arith.addf %10, %11 : vector<16x32xf32>
    %c0_15 = arith.constant 0 : index
    %c0_16 = arith.constant 0 : index
    %c0_17 = arith.constant 0 : index
    %13 = vector.load %arg8[%c0_15, %c0_16, %c0_17] : memref<4x16x32xf32, #tpu.memory_space<vmem>>, vector<1x16x32xf32>
    %14 = vector.shape_cast %13 : vector<1x16x32xf32> to vector<16x32xf32>
    %15 = vector.shape_cast %12 : vector<16x32xf32> to vector<1x16x32xf32>
    tpu.vector_store %arg8[%c0_15, %c0_16, %c0_17], %15 {strides = array<i32>} : memref<4x16x32xf32, #tpu.memory_space<vmem>>, vector<1x16x32xf32>,
    %c1 = arith.constant 1 : index
    %c0_18 = arith.constant 0 : index
    %c0_19 = arith.constant 0 : index
    %16 = vector.load %arg8[%c1, %c0_18, %c0_19] : memref<4x16x32xf32, #tpu.memory_space<vmem>>, vector<1x16x32xf32>
    %17 = vector.shape_cast %16 : vector<1x16x32xf32> to vector<16x32xf32>
    %cst_20 = arith.constant dense<0.000000e+00> : vector<16x32xf32>
    %18 = tpu.matmul %4, %7, %cst_20 {dimension_numbers = #tpu.dot_dimension_numbers<[1], [0], [0], [1], [0, 0, 1, 1], [], []>} : vector<16x200xf32>, vector<200x32xf32>, vector<16x32xf32> -> vector<16x32xf32>
    %19 = arith.addf %17, %18 : vector<16x32xf32>
    %c1_21 = arith.constant 1 : index
    %c0_22 = arith.constant 0 : index
    %c0_23 = arith.constant 0 : index
    %20 = vector.load %arg8[%c1_21, %c0_22, %c0_23] : memref<4x16x32xf32, #tpu.memory_space<vmem>>, vector<1x16x32xf32>
    %21 = vector.shape_cast %20 : vector<1x16x32xf32> to vector<16x32xf32>
    %22 = vector.shape_cast %19 : vector<16x32xf32> to vector<1x16x32xf32>
    tpu.vector_store %arg8[%c1_21, %c0_22, %c0_23], %22 {strides = array<i32>} : memref<4x16x32xf32, #tpu.memory_space<vmem>>, vector<1x16x32xf32>,
    %c2 = arith.constant 2 : index
    %c0_24 = arith.constant 0 : index
    %c0_25 = arith.constant 0 : index
    %23 = vector.load %arg8[%c2, %c0_24, %c0_25] : memref<4x16x32xf32, #tpu.memory_space<vmem>>, vector<1x16x32xf32>
    %24 = vector.shape_cast %23 : vector<1x16x32xf32> to vector<16x32xf32>
    %cst_26 = arith.constant dense<0.000000e+00> : vector<16x32xf32>
    %25 = tpu.matmul %5, %8, %cst_26 {dimension_numbers = #tpu.dot_dimension_numbers<[1], [0], [0], [1], [0, 0, 1, 1], [], []>} : vector<16x200xf32>, vector<200x32xf32>, vector<16x32xf32> -> vector<16x32xf32>
    %26 = arith.addf %24, %25 : vector<16x32xf32>
    %c2_27 = arith.constant 2 : index
    %c0_28 = arith.constant 0 : index
    %c0_29 = arith.constant 0 : index
    %27 = vector.load %arg8[%c2_27, %c0_28, %c0_29] : memref<4x16x32xf32, #tpu.memory_space<vmem>>, vector<1x16x32xf32>
    %28 = vector.shape_cast %27 : vector<1x16x32xf32> to vector<16x32xf32>
    %29 = vector.shape_cast %26 : vector<16x32xf32> to vector<1x16x32xf32>
    tpu.vector_store %arg8[%c2_27, %c0_28, %c0_29], %29 {strides = array<i32>} : memref<4x16x32xf32, #tpu.memory_space<vmem>>, vector<1x16x32xf32>,
    %c3 = arith.constant 3 : index
    %c0_30 = arith.constant 0 : index
    %c0_31 = arith.constant 0 : index
    %30 = vector.load %arg8[%c3, %c0_30, %c0_31] : memref<4x16x32xf32, #tpu.memory_space<vmem>>, vector<1x16x32xf32>
    %31 = vector.shape_cast %30 : vector<1x16x32xf32> to vector<16x32xf32>
    %cst_32 = arith.constant dense<0.000000e+00> : vector<16x32xf32>
    %32 = tpu.matmul %6, %8, %cst_32 {dimension_numbers = #tpu.dot_dimension_numbers<[1], [0], [0], [1], [0, 0, 1, 1], [], []>} : vector<16x200xf32>, vector<200x32xf32>, vector<16x32xf32> -> vector<16x32xf32>
    %33 = arith.addf %31, %32 : vector<16x32xf32>
    %c3_33 = arith.constant 3 : index
    %c0_34 = arith.constant 0 : index
    %c0_35 = arith.constant 0 : index
    %34 = vector.load %arg8[%c3_33, %c0_34, %c0_35] : memref<4x16x32xf32, #tpu.memory_space<vmem>>, vector<1x16x32xf32>
    %35 = vector.shape_cast %34 : vector<1x16x32xf32> to vector<16x32xf32>
    %36 = vector.shape_cast %33 : vector<16x32xf32> to vector<1x16x32xf32>
    tpu.vector_store %arg8[%c3_33, %c0_34, %c0_35], %36 {strides = array<i32>} : memref<4x16x32xf32, #tpu.memory_space<vmem>>, vector<1x16x32xf32>,
    %c0_i32_36 = arith.constant 0 : i32
    %37 = arith.cmpi eq, %arg0, %c0_i32_36 : i32
    %38 = arith.extui %37 : i1 to i32
    %c0_i32_37 = arith.constant 0 : i32
    %39 = arith.cmpi ne, %38, %c0_i32_37 : i32
    scf.if %39 {
      %c0_38 = arith.constant 0 : index
      %c0_39 = arith.constant 0 : index
      %c0_40 = arith.constant 0 : index
      %40 = vector.load %arg8[%c0_38, %c0_39, %c0_40] : memref<4x16x32xf32, #tpu.memory_space<vmem>>, vector<1x16x32xf32>
      %41 = vector.shape_cast %40 : vector<1x16x32xf32> to vector<16x32xf32>
      %c1_41 = arith.constant 1 : index
      %c0_42 = arith.constant 0 : index
      %c0_43 = arith.constant 0 : index
      %42 = vector.load %arg8[%c1_41, %c0_42, %c0_43] : memref<4x16x32xf32, #tpu.memory_space<vmem>>, vector<1x16x32xf32>
      %43 = vector.shape_cast %42 : vector<1x16x32xf32> to vector<16x32xf32>
      %c2_44 = arith.constant 2 : index
      %c0_45 = arith.constant 0 : index
      %c0_46 = arith.constant 0 : index
      %44 = vector.load %arg8[%c2_44, %c0_45, %c0_46] : memref<4x16x32xf32, #tpu.memory_space<vmem>>, vector<1x16x32xf32>
      %45 = vector.shape_cast %44 : vector<1x16x32xf32> to vector<16x32xf32>
      %c3_47 = arith.constant 3 : index
      %c0_48 = arith.constant 0 : index
      %c0_49 = arith.constant 0 : index
      %46 = vector.load %arg8[%c3_47, %c0_48, %c0_49] : memref<4x16x32xf32, #tpu.memory_space<vmem>>, vector<1x16x32xf32>
      %47 = vector.shape_cast %46 : vector<1x16x32xf32> to vector<16x32xf32>
      %cst_50 = arith.constant dense<0.000000e+00> : vector<16x16xf32>
      %48 = tpu.matmul %41, %41, %cst_50 {dimension_numbers = #tpu.dot_dimension_numbers<[1], [1], [0], [0], [0, 0, 1, 0], [], []>} : vector<16x32xf32>, vector<16x32xf32>, vector<16x16xf32> -> vector<16x16xf32>
      %cst_51 = arith.constant dense<0.000000e+00> : vector<16x16xf32>
      %49 = tpu.matmul %43, %43, %cst_51 {dimension_numbers = #tpu.dot_dimension_numbers<[1], [1], [0], [0], [0, 0, 1, 0], [], []>} : vector<16x32xf32>, vector<16x32xf32>, vector<16x16xf32> -> vector<16x16xf32>
      %50 = arith.addf %48, %49 : vector<16x16xf32>
      %cst_52 = arith.constant dense<0.000000e+00> : vector<16x16xf32>
      %51 = tpu.matmul %43, %41, %cst_52 {dimension_numbers = #tpu.dot_dimension_numbers<[1], [1], [0], [0], [0, 0, 1, 0], [], []>} : vector<16x32xf32>, vector<16x32xf32>, vector<16x16xf32> -> vector<16x16xf32>
      %cst_53 = arith.constant dense<0.000000e+00> : vector<16x16xf32>
      %52 = tpu.matmul %41, %43, %cst_53 {dimension_numbers = #tpu.dot_dimension_numbers<[1], [1], [0], [0], [0, 0, 1, 0], [], []>} : vector<16x32xf32>, vector<16x32xf32>, vector<16x16xf32> -> vector<16x16xf32>
      %53 = arith.subf %51, %52 : vector<16x16xf32>
      %cst_54 = arith.constant dense<0.000000e+00> : vector<16x16xf32>
      %54 = tpu.matmul %45, %41, %cst_54 {dimension_numbers = #tpu.dot_dimension_numbers<[1], [1], [0], [0], [0, 0, 1, 0], [], []>} : vector<16x32xf32>, vector<16x32xf32>, vector<16x16xf32> -> vector<16x16xf32>
      %cst_55 = arith.constant dense<0.000000e+00> : vector<16x16xf32>
      %55 = tpu.matmul %47, %43, %cst_55 {dimension_numbers = #tpu.dot_dimension_numbers<[1], [1], [0], [0], [0, 0, 1, 0], [], []>} : vector<16x32xf32>, vector<16x32xf32>, vector<16x16xf32> -> vector<16x16xf32>
      %56 = arith.addf %54, %55 : vector<16x16xf32>
      %cst_56 = arith.constant dense<0.000000e+00> : vector<16x16xf32>
      %57 = tpu.matmul %47, %41, %cst_56 {dimension_numbers = #tpu.dot_dimension_numbers<[1], [1], [0], [0], [0, 0, 1, 0], [], []>} : vector<16x32xf32>, vector<16x32xf32>, vector<16x16xf32> -> vector<16x16xf32>
      %cst_57 = arith.constant dense<0.000000e+00> : vector<16x16xf32>
      %58 = tpu.matmul %45, %43, %cst_57 {dimension_numbers = #tpu.dot_dimension_numbers<[1], [1], [0], [0], [0, 0, 1, 0], [], []>} : vector<16x32xf32>, vector<16x32xf32>, vector<16x16xf32> -> vector<16x16xf32>
      %59 = arith.subf %57, %58 : vector<16x16xf32>
      %60 = tpu.concatenate %50, %53, %56, %59 in 1 : vector<16x16xf32>, vector<16x16xf32>, vector<16x16xf32>, vector<16x16xf32> -> vector<16x64xf32>
      %cst_58 = arith.constant 0.000000e+00 : f32
      %61 = vector.broadcast %cst_58 : f32 to vector<16x64xf32>
      %62 = tpu.concatenate %60, %61 in 1 : vector<16x64xf32>, vector<16x64xf32> -> vector<16x128xf32>
      %c0_59 = arith.constant 0 : index
      %c0_60 = arith.constant 0 : index
      %63 = vector.load %arg7[%c0_59, %c0_60] : memref<16x128xf32, #tpu.memory_space<vmem>>, vector<16x128xf32>
      tpu.vector_store %arg7[%c0_59, %c0_60], %62 {strides = array<i32>} : memref<16x128xf32, #tpu.memory_space<vmem>>, vector<16x128xf32>,
    } else {
    }
    return
  }
  func.func @transform_0(%arg0: i32) -> (i32, i32) {
    %c0_i32 = arith.constant 0 : i32
    %c0_i32_0 = arith.constant 0 : i32
    return %c0_i32, %arg0 : i32, i32
  }
  func.func @transform_1(%arg0: i32) -> (i32, i32) {
    %c0_i32 = arith.constant 0 : i32
    %c0_i32_0 = arith.constant 0 : i32
    return %c0_i32, %arg0 : i32, i32
  }
  func.func @transform_2(%arg0: i32) -> (i32, i32) {
    %c0_i32 = arith.constant 0 : i32
    %c0_i32_0 = arith.constant 0 : i32
    return %c0_i32, %arg0 : i32, i32
  }
  func.func @transform_3(%arg0: i32) -> (i32, i32) {
    %c0_i32 = arith.constant 0 : i32
    %c0_i32_0 = arith.constant 0 : i32
    return %c0_i32, %arg0 : i32, i32
  }
  func.func @transform_4(%arg0: i32) -> (i32, i32) {
    %c0_i32 = arith.constant 0 : i32
    %c0_i32_0 = arith.constant 0 : i32
    return %arg0, %c0_i32 : i32, i32
  }
  func.func @transform_5(%arg0: i32) -> (i32, i32) {
    %c0_i32 = arith.constant 0 : i32
    %c0_i32_0 = arith.constant 0 : i32
    return %arg0, %c0_i32 : i32, i32
  }
  func.func @transform_6(%arg0: i32) -> (i32, i32) {
    %c0_i32 = arith.constant 0 : i32
    %c0_i32_0 = arith.constant 0 : i32
    %c0_i32_1 = arith.constant 0 : i32
    return %c0_i32, %c0_i32_0 : i32, i32
  }
}

</mosaic_0001>

<llo_original>
// kernel: tpu_custom_call.1
$region0: #{tpu_custom_call.1}
  #allocation0 [shape = 'u32[]', space=smem, size = 0x4, offset = 0x4, fixed_abs, tag = 'smem constant byte address 0x4 - core index']
  #allocation1 [shape = 'u32[144,128]{1,0:T(1,128)}', space=vmem, size = 0x12000, scoped, tag = 'internal scratch']
  #allocation2 [shape = 'f32[4,16,32]{2,1,0:T(8,128)}', space=vmem, size = 0x8000, scoped, tag = 'scratch operand']
  %s0 = inlined_call_operand.vmem [shape: f32[16,200], index: 0, kind: input, shape index: {}]
  %s1 = inlined_call_operand.vmem [shape: f32[16,200], index: 1, kind: input, shape index: {}]
  %s2 = inlined_call_operand.vmem [shape: f32[16,200], index: 2, kind: input, shape index: {}]
  %s3 = inlined_call_operand.vmem [shape: f32[16,200], index: 3, kind: input, shape index: {}]
  %s4 = inlined_call_operand.vmem [shape: f32[200,32], index: 4, kind: input, shape index: {}]
  %s5 = inlined_call_operand.vmem [shape: f32[200,32], index: 5, kind: input, shape index: {}]
  %s6 = inlined_call_operand.hbm [shape: f32[16,128], index: 6, kind: output, shape index: {}]
  %s7 = sld [smem:[#allocation0]]
  $region42: #{tpu_custom_call.1} parent=0
    _
  %s9 = ssub.s32 1, %s7
  %s10 = scalar_select 0, %s9, %s7
  $region1: #{tpu_custom_call.1} parent=0
    #allocation3 [shape = 'u8[8192]{0}', space=vmem, size = 0x2000, scoped, tag = 'output window, operand 0, single buffered']
    #allocation4 [shape = 's32[1]{0}', space=sflag, size = 0x4, scoped, tag = 'scoped memory for tpu_custom_call.1']
    %11 = vsyncpa [#allocation4], 0
    // Predicated region
    $region2: #{tpu_custom_call.1} parent=1 // pred_check
      _
    $region3: #{tpu_custom_call.1} parent=1 // pred_check_branch
      %13 = sbr.rel (0) target = $region5
    $region4: #{tpu_custom_call.1} parent=1 // pred_region
      _
    $region5: #{tpu_custom_call.1} parent=1 // pred_fallthru
      _
    // Predicated region
    $region6: #{tpu_custom_call.1} parent=1 // pred_check
      _
    $region7: #{tpu_custom_call.1} parent=1 // pred_check_branch
      %15 = sbr.rel (0) target = $region9
    $region8: #{tpu_custom_call.1} parent=1 // pred_region
      _
    $region9: #{tpu_custom_call.1} parent=1 // pred_fallthru
      _
    // Predicated region
    $region10: #{tpu_custom_call.1} parent=1 // pred_check
      _
    $region11: #{tpu_custom_call.1} parent=1 // pred_check_branch
      %17 = sbr.rel (0) target = $region13
    $region12: #{tpu_custom_call.1} parent=1 // pred_region
      _
    $region13: #{tpu_custom_call.1} parent=1 // pred_fallthru
      _
    // Predicated region
    $region14: #{tpu_custom_call.1} parent=1 // pred_check
      _
    $region15: #{tpu_custom_call.1} parent=1 // pred_check_branch
      %19 = sbr.rel (0) target = $region17
    $region16: #{tpu_custom_call.1} parent=1 // pred_region
      _
    $region17: #{tpu_custom_call.1} parent=1 // pred_fallthru
      _
    // Predicated region
    $region18: #{tpu_custom_call.1} parent=1 // pred_check
      _
    $region19: #{tpu_custom_call.1} parent=1 // pred_check_branch
      %21 = sbr.rel (0) target = $region21
    $region20: #{tpu_custom_call.1} parent=1 // pred_region
      _
    $region21: #{tpu_custom_call.1} parent=1 // pred_fallthru
      _
    // Predicated region
    $region22: #{tpu_custom_call.1} parent=1 // pred_check
      _
    $region23: #{tpu_custom_call.1} parent=1 // pred_check_branch
      %23 = sbr.rel (0) target = $region25
    $region24: #{tpu_custom_call.1} parent=1 // pred_region
      _
    $region25: #{tpu_custom_call.1} parent=1 // pred_fallthru
      _
    %p24 = scmp.eq.s32.totalorder 0, 0
    // Predicated region
    $region26: #{tpu_custom_call.1} parent=1 // pred_check
      %p25 = pneg %p24
    $region27: #{tpu_custom_call.1} parent=1 // pred_check_branch
      %27 = sbr.rel (%p25) target = $region29
    $region28: #{tpu_custom_call.1} parent=1 // pred_region
      %vm28 = vcmask 261120
      %29 = vst.msk [vmem:[#allocation2] sm:$0xff] %vm28, 0.0
      %30 = vst.msk [vmem:[#allocation2 + $0x8] sm:$0xff] %vm28, 0.0
      %31 = vst.msk [vmem:[#allocation2 + $0x10] sm:$0xff] %vm28, 0.0
      %32 = vst.msk [vmem:[#allocation2 + $0x18] sm:$0xff] %vm28, 0.0
      %33 = vst.msk [vmem:[#allocation2 + $0x20] sm:$0xff] %vm28, 0.0
      %34 = vst.msk [vmem:[#allocation2 + $0x28] sm:$0xff] %vm28, 0.0
      %35 = vst.msk [vmem:[#allocation2 + $0x30] sm:$0xff] %vm28, 0.0
      %36 = vst.msk [vmem:[#allocation2 + $0x38] sm:$0xff] %vm28, 0.0
    $region29: #{tpu_custom_call.1} parent=1 // pred_fallthru
      _
    %v37 = vld [vmem:[%s0] sm:$0xff]
    %v38 = vld [vmem:[%s0 + $0x8] sm:$0xff]
    %v39 = vld [vmem:[%s0 + $0x10] sm:$0xff]
    %v40 = vld [vmem:[%s0 + $0x18] sm:$0xff]
    %v41 = vld [vmem:[%s1] sm:$0xff]
    %v42 = vld [vmem:[%s1 + $0x8] sm:$0xff]
    %v43 = vld [vmem:[%s1 + $0x10] sm:$0xff]
    %v44 = vld [vmem:[%s1 + $0x18] sm:$0xff]
    %v45 = vld [vmem:[%s2] sm:$0xff]
    %v46 = vld [vmem:[%s2 + $0x8] sm:$0xff]
    %v47 = vld [vmem:[%s2 + $0x10] sm:$0xff]
    %v48 = vld [vmem:[%s2 + $0x18] sm:$0xff]
    %v49 = vld [vmem:[%s3] sm:$0xff]
    %v50 = vld [vmem:[%s3 + $0x8] sm:$0xff]
    %v51 = vld [vmem:[%s3 + $0x10] sm:$0xff]
    %v52 = vld [vmem:[%s3 + $0x18] sm:$0xff]
    %v53 = vld [vmem:[%s4] sm:$0xff]
    %v54 = vld [vmem:[%s4 + $0x8] sm:$0xff]
    %v55 = vld [vmem:[%s4 + $0x10] sm:$0xff]
    %v56 = vld [vmem:[%s4 + $0x18] sm:$0xff]
    %v57 = vld [vmem:[%s4 + $0x20] sm:$0xff]
    %v58 = vld [vmem:[%s4 + $0x28] sm:$0xff]
    %v59 = vld [vmem:[%s4 + $0x30] sm:$0xff]
    %v60 = vld [vmem:[%s4 + $0x38] sm:$0xff]
    %v61 = vld [vmem:[%s4 + $0x40] sm:$0xff]
    %v62 = vld [vmem:[%s4 + $0x48] sm:$0xff]
    %v63 = vld [vmem:[%s4 + $0x50] sm:$0xff]
    %v64 = vld [vmem:[%s4 + $0x58] sm:$0xff]
    %v65 = vld [vmem:[%s4 + $0x60] sm:$0xff]
    %v66 = vld [vmem:[%s4 + $0x68] sm:$0xff]
    %v67 = vld [vmem:[%s4 + $0x70] sm:$0xff]
    %v68 = vld [vmem:[%s4 + $0x78] sm:$0xff]
    %v69 = vld [vmem:[%s4 + $0x80] sm:$0xff]
    %v70 = vld [vmem:[%s4 + $0x88] sm:$0xff]
    %v71 = vld [vmem:[%s4 + $0x90] sm:$0xff]
    %v72 = vld [vmem:[%s4 + $0x98] sm:$0xff]
    %v73 = vld [vmem:[%s4 + $0xa0] sm:$0xff]
    %v74 = vld [vmem:[%s4 + $0xa8] sm:$0xff]
    %v75 = vld [vmem:[%s4 + $0xb0] sm:$0xff]
    %v76 = vld [vmem:[%s4 + $0xb8] sm:$0xff]
    %v77 = vld [vmem:[%s4 + $0xc0] sm:$0xff]
    %v78 = vld [vmem:[%s5] sm:$0xff]
    %v79 = vld [vmem:[%s5 + $0x8] sm:$0xff]
    %v80 = vld [vmem:[%s5 + $0x10] sm:$0xff]
    %v81 = vld [vmem:[%s5 + $0x18] sm:$0xff]
    %v82 = vld [vmem:[%s5 + $0x20] sm:$0xff]
    %v83 = vld [vmem:[%s5 + $0x28] sm:$0xff]
    %v84 = vld [vmem:[%s5 + $0x30] sm:$0xff]
    %v85 = vld [vmem:[%s5 + $0x38] sm:$0xff]
    %v86 = vld [vmem:[%s5 + $0x40] sm:$0xff]
    %v87 = vld [vmem:[%s5 + $0x48] sm:$0xff]
    %v88 = vld [vmem:[%s5 + $0x50] sm:$0xff]
    %v89 = vld [vmem:[%s5 + $0x58] sm:$0xff]
    %v90 = vld [vmem:[%s5 + $0x60] sm:$0xff]
    %v91 = vld [vmem:[%s5 + $0x68] sm:$0xff]
    %v92 = vld [vmem:[%s5 + $0x70] sm:$0xff]
    %v93 = vld [vmem:[%s5 + $0x78] sm:$0xff]
    %v94 = vld [vmem:[%s5 + $0x80] sm:$0xff]
    %v95 = vld [vmem:[%s5 + $0x88] sm:$0xff]
    %v96 = vld [vmem:[%s5 + $0x90] sm:$0xff]
    %v97 = vld [vmem:[%s5 + $0x98] sm:$0xff]
    %v98 = vld [vmem:[%s5 + $0xa0] sm:$0xff]
    %v99 = vld [vmem:[%s5 + $0xa8] sm:$0xff]
    %v100 = vld [vmem:[%s5 + $0xb0] sm:$0xff]
    %v101 = vld [vmem:[%s5 + $0xb8] sm:$0xff]
    %v102 = vld [vmem:[%s5 + $0xc0] sm:$0xff]
    %v103 = vld [vmem:[#allocation2] sm:$0xff]
    %v104 = vld [vmem:[#allocation2 + $0x8] sm:$0xff]
    %vm105 = vcmask 588800
    %v107 = vsel %vm105, %v38, 0
    %v110 = vsel %vm105, %v40, 0
    %112 = vmatprep.subr.mxu0 0.0
    %113 = vmatpush1.msra.mxu0 %v53
    %114 = vmatprep.subr.mxu0 0.0
    %115 = vmatpush1.msra.mxu0 %v54
    %116 = vmatprep.subr.mxu0 0.0
    %117 = vmatpush1.msra.mxu0 %v55
    %118 = vmatprep.subr.mxu0 0.0
    %119 = vmatpush1.msra.mxu0 %v56
    %120 = vmatprep.subr.mxu0 0.0
    %121 = vmatpush1.msra.mxu0 %v57
    %122 = vmatprep.subr.mxu0 0.0
    %123 = vmatpush1.msra.mxu0 %v58
    %124 = vmatprep.subr.mxu0 0.0
    %125 = vmatpush1.msra.mxu0 %v59
    %126 = vmatprep.subr.mxu0 0.0
    %127 = vmatpush1.msra.mxu0 %v60
    %128 = vmatprep.subr.mxu0 0.0
    %129 = vmatpush1.msra.mxu0 %v61
    %130 = vmatprep.subr.mxu0 0.0
    %131 = vmatpush1.msra.mxu0 %v62
    %132 = vmatprep.subr.mxu0 0.0
    %133 = vmatpush1.msra.mxu0 %v63
    %134 = vmatprep.subr.mxu0 0.0
    %135 = vmatpush1.msra.mxu0 %v64
    %136 = vmatprep.subr.mxu0 0.0
    %137 = vmatpush1.msra.mxu0 %v65
    %138 = vmatprep.subr.mxu0 0.0
    %139 = vmatpush1.msra.mxu0 %v66
    %140 = vmatprep.subr.mxu0 0.0
    %141 = vmatpush1.msra.mxu0 %v67
    %142 = vmatprep.subr.mxu0 0.0
    %143 = vmatpush1.msra.mxu0 %v68
    %144 = vmatprep.subr.mxu0 0.0
    %145 = vmatpush1.msra.mxu0 %v69
    %146 = vmatprep.subr.mxu0 0.0
    %147 = vmatpush1.msra.mxu0 %v70
    %148 = vmatprep.subr.mxu0 0.0
    %149 = vmatpush1.msra.mxu0 %v71
    %150 = vmatprep.subr.mxu0 0.0
    %151 = vmatpush1.msra.mxu0 %v72
    %152 = vmatprep.subr.mxu0 0.0
    %153 = vmatpush1.msra.mxu0 %v73
    %154 = vmatprep.subr.mxu0 0.0
    %155 = vmatpush1.msra.mxu0 %v74
    %156 = vmatprep.subr.mxu0 0.0
    %157 = vmatpush1.msra.mxu0 %v75
    %158 = vmatprep.subr.mxu0 0.0
    %159 = vmatpush1.msra.mxu0 %v76
    %160 = vmatprep.subr.mxu0 0.0
    %161 = vmatpush1.msra.mxu0 %v77
    %162 = vmatprep.subr.mxu0 0.0
    %163 = vmatpush1.msra.mxu0 0.0
    %164 = vmatprep.subr.mxu0 0.0
    %165 = vmatpush1.msra.mxu0 0.0
    %166 = vmatprep.subr.mxu0 0.0
    %167 = vmatpush1.msra.mxu0 0.0
    %168 = vmatprep.subr.mxu0 0.0
    %169 = vmatpush1.msra.mxu0 0.0
    %170 = vmatprep.subr.mxu0 0.0
    %171 = vmatpush1.msra.mxu0 0.0
    %172 = vmatprep.subr.mxu0 0.0
    %173 = vmatpush1.msra.mxu0 0.0
    %174 = vmatprep.subr.mxu0 0.0
    %175 = vmatpush1.msra.mxu0 0.0
    %176 = vmatprep.mubr.f32.mxu0 %v107
    %177 = vmatmul.mubr.f32.gmra.mrb[0].mxu0 %v37
    %v178 = vpop.f32.mrb[0].mxu0
    %v179 = vadd.f32 0.0, %v178
    %v180 = vpop.f32.mrb[0].mxu0
    %181 = vmatprep.mubr.f32.mxu0 %v110
    %182 = vmatmul.mubr.f32.gmra.mrb[0].mxu0 %v39
    %v183 = vpop.f32.mrb[0].mxu0
    %v184 = vadd.f32 0.0, %v183
    %v185 = vpop.f32.mrb[0].mxu0
    %186 = vdwg.mxu0
    %v187 = vadd.f32 %v103, %v179
    %v188 = vadd.f32 %v104, %v184
    %vm189 = vcmask 261120
    %190 = vst.msk [vmem:[#allocation2] sm:$0xff] %vm189, %v187
    %191 = vst.msk [vmem:[#allocation2 + $0x8] sm:$0xff] %vm189, %v188
    %s192 = scalar_lea.vmem [#allocation2], 16
    %v193 = vld [vmem:[%s192] sm:$0xff]
    %v194 = vld [vmem:[%s192 + $0x8] sm:$0xff]
    %v196 = vsel %vm105, %v42, 0
    %v199 = vsel %vm105, %v44, 0
    %201 = vmatprep.subr.mxu0 0.0
    %202 = vmatpush1.msra.mxu0 %v53
    %203 = vmatprep.subr.mxu0 0.0
    %204 = vmatpush1.msra.mxu0 %v54
    %205 = vmatprep.subr.mxu0 0.0
    %206 = vmatpush1.msra.mxu0 %v55
    %207 = vmatprep.subr.mxu0 0.0
    %208 = vmatpush1.msra.mxu0 %v56
    %209 = vmatprep.subr.mxu0 0.0
    %210 = vmatpush1.msra.mxu0 %v57
    %211 = vmatprep.subr.mxu0 0.0
    %212 = vmatpush1.msra.mxu0 %v58
    %213 = vmatprep.subr.mxu0 0.0
    %214 = vmatpush1.msra.mxu0 %v59
    %215 = vmatprep.subr.mxu0 0.0
    %216 = vmatpush1.msra.mxu0 %v60
    %217 = vmatprep.subr.mxu0 0.0
    %218 = vmatpush1.msra.mxu0 %v61
    %219 = vmatprep.subr.mxu0 0.0
    %220 = vmatpush1.msra.mxu0 %v62
    %221 = vmatprep.subr.mxu0 0.0
    %222 = vmatpush1.msra.mxu0 %v63
    %223 = vmatprep.subr.mxu0 0.0
    %224 = vmatpush1.msra.mxu0 %v64
    %225 = vmatprep.subr.mxu0 0.0
    %226 = vmatpush1.msra.mxu0 %v65
    %227 = vmatprep.subr.mxu0 0.0
    %228 = vmatpush1.msra.mxu0 %v66
    %229 = vmatprep.subr.mxu0 0.0
    %230 = vmatpush1.msra.mxu0 %v67
    %231 = vmatprep.subr.mxu0 0.0
    %232 = vmatpush1.msra.mxu0 %v68
    %233 = vmatprep.subr.mxu0 0.0
    %234 = vmatpush1.msra.mxu0 %v69
    %235 = vmatprep.subr.mxu0 0.0
    %236 = vmatpush1.msra.mxu0 %v70
    %237 = vmatprep.subr.mxu0 0.0
    %238 = vmatpush1.msra.mxu0 %v71
    %239 = vmatprep.subr.mxu0 0.0
    %240 = vmatpush1.msra.mxu0 %v72
    %241 = vmatprep.subr.mxu0 0.0
    %242 = vmatpush1.msra.mxu0 %v73
    %243 = vmatprep.subr.mxu0 0.0
    %244 = vmatpush1.msra.mxu0 %v74
    %245 = vmatprep.subr.mxu0 0.0
    %246 = vmatpush1.msra.mxu0 %v75
    %247 = vmatprep.subr.mxu0 0.0
    %248 = vmatpush1.msra.mxu0 %v76
    %249 = vmatprep.subr.mxu0 0.0
    %250 = vmatpush1.msra.mxu0 %v77
    %251 = vmatprep.subr.mxu0 0.0
    %252 = vmatpush1.msra.mxu0 0.0
    %253 = vmatprep.subr.mxu0 0.0
    %254 = vmatpush1.msra.mxu0 0.0
    %255 = vmatprep.subr.mxu0 0.0
    %256 = vmatpush1.msra.mxu0 0.0
    %257 = vmatprep.subr.mxu0 0.0
    %258 = vmatpush1.msra.mxu0 0.0
    %259 = vmatprep.subr.mxu0 0.0
    %260 = vmatpush1.msra.mxu0 0.0
    %261 = vmatprep.subr.mxu0 0.0
    %262 = vmatpush1.msra.mxu0 0.0
    %263 = vmatprep.subr.mxu0 0.0
    %264 = vmatpush1.msra.mxu0 0.0
    %265 = vmatprep.mubr.f32.mxu0 %v196
    %266 = vmatmul.mubr.f32.gmra.mrb[0].mxu0 %v41
    %v267 = vpop.f32.mrb[0].mxu0
    %v268 = vadd.f32 0.0, %v267
    %v269 = vpop.f32.mrb[0].mxu0
    %270 = vmatprep.mubr.f32.mxu0 %v199
    %271 = vmatmul.mubr.f32.gmra.mrb[0].mxu0 %v43
    %v272 = vpop.f32.mrb[0].mxu0
    %v273 = vadd.f32 0.0, %v272
    %v274 = vpop.f32.mrb[0].mxu0
    %275 = vdwg.mxu0
    %v276 = vadd.f32 %v193, %v268
    %v277 = vadd.f32 %v194, %v273
    %278 = vst.msk [vmem:[%s192] sm:$0xff] %vm189, %v276
    %279 = vst.msk [vmem:[%s192 + $0x8] sm:$0xff] %vm189, %v277
    %s280 = scalar_lea.vmem [#allocation2], 32
    %v281 = vld [vmem:[%s280] sm:$0xff]
    %v282 = vld [vmem:[%s280 + $0x8] sm:$0xff]
    %v284 = vsel %vm105, %v46, 0
    %v287 = vsel %vm105, %v48, 0
    %289 = vmatprep.subr.mxu0 0.0
    %290 = vmatpush1.msra.mxu0 %v78
    %291 = vmatprep.subr.mxu0 0.0
    %292 = vmatpush1.msra.mxu0 %v79
    %293 = vmatprep.subr.mxu0 0.0
    %294 = vmatpush1.msra.mxu0 %v80
    %295 = vmatprep.subr.mxu0 0.0
    %296 = vmatpush1.msra.mxu0 %v81
    %297 = vmatprep.subr.mxu0 0.0
    %298 = vmatpush1.msra.mxu0 %v82
    %299 = vmatprep.subr.mxu0 0.0
    %300 = vmatpush1.msra.mxu0 %v83
    %301 = vmatprep.subr.mxu0 0.0
    %302 = vmatpush1.msra.mxu0 %v84
    %303 = vmatprep.subr.mxu0 0.0
    %304 = vmatpush1.msra.mxu0 %v85
    %305 = vmatprep.subr.mxu0 0.0
    %306 = vmatpush1.msra.mxu0 %v86
    %307 = vmatprep.subr.mxu0 0.0
    %308 = vmatpush1.msra.mxu0 %v87
    %309 = vmatprep.subr.mxu0 0.0
    %310 = vmatpush1.msra.mxu0 %v88
    %311 = vmatprep.subr.mxu0 0.0
    %312 = vmatpush1.msra.mxu0 %v89
    %313 = vmatprep.subr.mxu0 0.0
    %314 = vmatpush1.msra.mxu0 %v90
    %315 = vmatprep.subr.mxu0 0.0
    %316 = vmatpush1.msra.mxu0 %v91
    %317 = vmatprep.subr.mxu0 0.0
    %318 = vmatpush1.msra.mxu0 %v92
    %319 = vmatprep.subr.mxu0 0.0
    %320 = vmatpush1.msra.mxu0 %v93
    %321 = vmatprep.subr.mxu0 0.0
    %322 = vmatpush1.msra.mxu0 %v94
    %323 = vmatprep.subr.mxu0 0.0
    %324 = vmatpush1.msra.mxu0 %v95
    %325 = vmatprep.subr.mxu0 0.0
    %326 = vmatpush1.msra.mxu0 %v96
    %327 = vmatprep.subr.mxu0 0.0
    %328 = vmatpush1.msra.mxu0 %v97
    %329 = vmatprep.subr.mxu0 0.0
    %330 = vmatpush1.msra.mxu0 %v98
    %331 = vmatprep.subr.mxu0 0.0
    %332 = vmatpush1.msra.mxu0 %v99
    %333 = vmatprep.subr.mxu0 0.0
    %334 = vmatpush1.msra.mxu0 %v100
    %335 = vmatprep.subr.mxu0 0.0
    %336 = vmatpush1.msra.mxu0 %v101
    %337 = vmatprep.subr.mxu0 0.0
    %338 = vmatpush1.msra.mxu0 %v102
    %339 = vmatprep.subr.mxu0 0.0
    %340 = vmatpush1.msra.mxu0 0.0
    %341 = vmatprep.subr.mxu0 0.0
    %342 = vmatpush1.msra.mxu0 0.0
    %343 = vmatprep.subr.mxu0 0.0
    %344 = vmatpush1.msra.mxu0 0.0
    %345 = vmatprep.subr.mxu0 0.0
    %346 = vmatpush1.msra.mxu0 0.0
    %347 = vmatprep.subr.mxu0 0.0
    %348 = vmatpush1.msra.mxu0 0.0
    %349 = vmatprep.subr.mxu0 0.0
    %350 = vmatpush1.msra.mxu0 0.0
    %351 = vmatprep.subr.mxu0 0.0
    %352 = vmatpush1.msra.mxu0 0.0
    %353 = vmatprep.mubr.f32.mxu0 %v284
    %354 = vmatmul.mubr.f32.gmra.mrb[0].mxu0 %v45
    %v355 = vpop.f32.mrb[0].mxu0
    %v356 = vadd.f32 0.0, %v355
    %v357 = vpop.f32.mrb[0].mxu0
    %358 = vmatprep.mubr.f32.mxu0 %v287
    %359 = vmatmul.mubr.f32.gmra.mrb[0].mxu0 %v47
    %v360 = vpop.f32.mrb[0].mxu0
    %v361 = vadd.f32 0.0, %v360
    %v362 = vpop.f32.mrb[0].mxu0
    %363 = vdwg.mxu0
    %v364 = vadd.f32 %v281, %v356
    %v365 = vadd.f32 %v282, %v361
    %366 = vst.msk [vmem:[%s280] sm:$0xff] %vm189, %v364
    %367 = vst.msk [vmem:[%s280 + $0x8] sm:$0xff] %vm189, %v365
    %s368 = scalar_lea.vmem [#allocation2], 48
    %v369 = vld [vmem:[%s368] sm:$0xff]
    %v370 = vld [vmem:[%s368 + $0x8] sm:$0xff]
    %v372 = vsel %vm105, %v50, 0
    %v375 = vsel %vm105, %v52, 0
    %377 = vmatprep.subr.mxu0 0.0
    %378 = vmatpush1.msra.mxu0 %v78
    %379 = vmatprep.subr.mxu0 0.0
    %380 = vmatpush1.msra.mxu0 %v79
    %381 = vmatprep.subr.mxu0 0.0
    %382 = vmatpush1.msra.mxu0 %v80
    %383 = vmatprep.subr.mxu0 0.0
    %384 = vmatpush1.msra.mxu0 %v81
    %385 = vmatprep.subr.mxu0 0.0
    %386 = vmatpush1.msra.mxu0 %v82
    %387 = vmatprep.subr.mxu0 0.0
    %388 = vmatpush1.msra.mxu0 %v83
    %389 = vmatprep.subr.mxu0 0.0
    %390 = vmatpush1.msra.mxu0 %v84
    %391 = vmatprep.subr.mxu0 0.0
    %392 = vmatpush1.msra.mxu0 %v85
    %393 = vmatprep.subr.mxu0 0.0
    %394 = vmatpush1.msra.mxu0 %v86
    %395 = vmatprep.subr.mxu0 0.0
    %396 = vmatpush1.msra.mxu0 %v87
    %397 = vmatprep.subr.mxu0 0.0
    %398 = vmatpush1.msra.mxu0 %v88
    %399 = vmatprep.subr.mxu0 0.0
    %400 = vmatpush1.msra.mxu0 %v89
    %401 = vmatprep.subr.mxu0 0.0
    %402 = vmatpush1.msra.mxu0 %v90
    %403 = vmatprep.subr.mxu0 0.0
    %404 = vmatpush1.msra.mxu0 %v91
    %405 = vmatprep.subr.mxu0 0.0
    %406 = vmatpush1.msra.mxu0 %v92
    %407 = vmatprep.subr.mxu0 0.0
    %408 = vmatpush1.msra.mxu0 %v93
    %409 = vmatprep.subr.mxu0 0.0
    %410 = vmatpush1.msra.mxu0 %v94
    %411 = vmatprep.subr.mxu0 0.0
    %412 = vmatpush1.msra.mxu0 %v95
    %413 = vmatprep.subr.mxu0 0.0
    %414 = vmatpush1.msra.mxu0 %v96
    %415 = vmatprep.subr.mxu0 0.0
    %416 = vmatpush1.msra.mxu0 %v97
    %417 = vmatprep.subr.mxu0 0.0
    %418 = vmatpush1.msra.mxu0 %v98
    %419 = vmatprep.subr.mxu0 0.0
    %420 = vmatpush1.msra.mxu0 %v99
    %421 = vmatprep.subr.mxu0 0.0
    %422 = vmatpush1.msra.mxu0 %v100
    %423 = vmatprep.subr.mxu0 0.0
    %424 = vmatpush1.msra.mxu0 %v101
    %425 = vmatprep.subr.mxu0 0.0
    %426 = vmatpush1.msra.mxu0 %v102
    %427 = vmatprep.subr.mxu0 0.0
    %428 = vmatpush1.msra.mxu0 0.0
    %429 = vmatprep.subr.mxu0 0.0
    %430 = vmatpush1.msra.mxu0 0.0
    %431 = vmatprep.subr.mxu0 0.0
    %432 = vmatpush1.msra.mxu0 0.0
    %433 = vmatprep.subr.mxu0 0.0
    %434 = vmatpush1.msra.mxu0 0.0
    %435 = vmatprep.subr.mxu0 0.0
    %436 = vmatpush1.msra.mxu0 0.0
    %437 = vmatprep.subr.mxu0 0.0
    %438 = vmatpush1.msra.mxu0 0.0
    %439 = vmatprep.subr.mxu0 0.0
    %440 = vmatpush1.msra.mxu0 0.0
    %441 = vmatprep.mubr.f32.mxu0 %v372
    %442 = vmatmul.mubr.f32.gmra.mrb[0].mxu0 %v49
    %v443 = vpop.f32.mrb[0].mxu0
    %v444 = vadd.f32 0.0, %v443
    %v445 = vpop.f32.mrb[0].mxu0
    %446 = vmatprep.mubr.f32.mxu0 %v375
    %447 = vmatmul.mubr.f32.gmra.mrb[0].mxu0 %v51
    %v448 = vpop.f32.mrb[0].mxu0
    %v449 = vadd.f32 0.0, %v448
    %v450 = vpop.f32.mrb[0].mxu0
    %451 = vdwg.mxu0
    %v452 = vadd.f32 %v369, %v444
    %v453 = vadd.f32 %v370, %v449
    %454 = vst.msk [vmem:[%s368] sm:$0xff] %vm189, %v452
    %455 = vst.msk [vmem:[%s368 + $0x8] sm:$0xff] %vm189, %v453
    // Predicated region
    $region30: #{tpu_custom_call.1} parent=1 // pred_check
      %p456 = pneg %p24
    $region31: #{tpu_custom_call.1} parent=1 // pred_check_branch
      %458 = sbr.rel (%p456) target = $region33
    $region32: #{tpu_custom_call.1} parent=1 // pred_region
      %v459 = vld [vmem:[#allocation2] sm:$0xff]
      %v460 = vld [vmem:[#allocation2 + $0x8] sm:$0xff]
      %v461 = vld [vmem:[%s192] sm:$0xff]
      %v462 = vld [vmem:[%s192 + $0x8] sm:$0xff]
      %v463 = vld [vmem:[%s280] sm:$0xff]
      %v464 = vld [vmem:[%s280 + $0x8] sm:$0xff]
      %v465 = vld [vmem:[%s368] sm:$0xff]
      %v466 = vld [vmem:[%s368 + $0x8] sm:$0xff]
      %v468 = vsel %vm189, %v461, 0
      %v471 = vsel %vm189, %v462, 0
      %473 = vmatprep.subr.mxu0 0.0
      %474 = vmatpush1.xpose.msra.mxu0 %v468
      %475 = vmatprep.subr.mxu0 0.0
      %476 = vmatpush1.xpose.msra.mxu0 %v471
      %477 = vmatprep.subr.mxu0 0.0
      %478 = vmatpush1.xpose.msra.mxu0 0.0
      %479 = vmatprep.subr.mxu0 0.0
      %480 = vmatpush1.xpose.msra.mxu0 0.0
      %481 = vmatprep.subr.mxu0 0.0
      %482 = vmatpush1.xpose.msra.mxu0 0.0
      %483 = vmatprep.subr.mxu0 0.0
      %484 = vmatpush1.xpose.msra.mxu0 0.0
      %485 = vmatprep.subr.mxu0 0.0
      %486 = vmatpush1.xpose.msra.mxu0 0.0
      %487 = vmatprep.subr.mxu0 0.0
      %488 = vmatpush1.xpose.msra.mxu0 0.0
      %489 = vmatprep.subr.mxu0 0.0
      %490 = vmatpush1.xpose.msra.mxu0 0.0
      %491 = vmatprep.subr.mxu0 0.0
      %492 = vmatpush1.xpose.msra.mxu0 0.0
      %493 = vmatprep.subr.mxu0 0.0
      %494 = vmatpush1.xpose.msra.mxu0 0.0
      %495 = vmatprep.subr.mxu0 0.0
      %496 = vmatpush1.xpose.msra.mxu0 0.0
      %497 = vmatprep.subr.mxu0 0.0
      %498 = vmatpush1.xpose.msra.mxu0 0.0
      %499 = vmatprep.subr.mxu0 0.0
      %500 = vmatpush1.xpose.msra.mxu0 0.0
      %501 = vmatprep.subr.mxu0 0.0
      %502 = vmatpush1.xpose.msra.mxu0 0.0
      %503 = vmatprep.subr.mxu0 0.0
      %504 = vmatpush1.xpose.msra.mxu0 0.0
      %505 = vmatprep.subr.mxu0 0.0
      %506 = vmatpush1.xpose.msra.mxu0 0.0
      %507 = vmatprep.subr.mxu0 0.0
      %508 = vmatpush1.xpose.msra.mxu0 0.0
      %509 = vmatprep.subr.mxu0 0.0
      %510 = vmatpush1.xpose.msra.mxu0 0.0
      %511 = vmatprep.subr.mxu0 0.0
      %512 = vmatpush1.xpose.msra.mxu0 0.0
      %513 = vmatprep.subr.mxu0 0.0
      %514 = vmatpush1.xpose.msra.mxu0 0.0
      %515 = vmatprep.subr.mxu0 0.0
      %516 = vmatpush1.xpose.msra.mxu0 0.0
      %517 = vmatprep.subr.mxu0 0.0
      %518 = vmatpush1.xpose.msra.mxu0 0.0
      %519 = vmatprep.subr.mxu0 0.0
      %520 = vmatpush1.xpose.msra.mxu0 0.0
      %521 = vmatprep.subr.mxu0 0.0
      %522 = vmatpush1.xpose.msra.mxu0 0.0
      %523 = vmatprep.subr.mxu0 0.0
      %524 = vmatpush1.xpose.msra.mxu0 0.0
      %525 = vmatprep.subr.mxu0 0.0
      %526 = vmatpush1.xpose.msra.mxu0 0.0
      %527 = vmatprep.subr.mxu0 0.0
      %528 = vmatpush1.xpose.msra.mxu0 0.0
      %529 = vmatprep.subr.mxu0 0.0
      %530 = vmatpush1.xpose.msra.mxu0 0.0
      %531 = vmatprep.subr.mxu0 0.0
      %532 = vmatpush1.xpose.msra.mxu0 0.0
      %533 = vmatprep.subr.mxu0 0.0
      %534 = vmatpush1.xpose.msra.mxu0 0.0
      %535 = vmatprep.subr.mxu0 0.0
      %536 = vmatpush1.xpose.msra.mxu0 0.0
      %537 = vmatprep.mubr.f32.mxu0 0.0
      %538 = vmatmul.mubr.f32.gmra.mrb[0].mxu0 %v468
      %v539 = vpop.f32.mrb[0].mxu0
      %v540 = vadd.f32 0.0, %v539
      %v541 = vpop.f32.mrb[0].mxu0
      %542 = vmatprep.mubr.f32.mxu0 0.0
      %543 = vmatmul.mubr.f32.gmra.mrb[0].mxu0 %v471
      %v544 = vpop.f32.mrb[0].mxu0
      %v545 = vadd.f32 0.0, %v544
      %v546 = vpop.f32.mrb[0].mxu0
      %547 = vdwg.mxu0
      %v549 = vsel %vm189, %v459, 0
      %v552 = vsel %vm189, %v460, 0
      %554 = vmatprep.subr.mxu0 0.0
      %555 = vmatpush1.xpose.msra.mxu0 %v549
      %556 = vmatprep.subr.mxu0 0.0
      %557 = vmatpush1.xpose.msra.mxu0 %v552
      %558 = vmatprep.subr.mxu0 0.0
      %559 = vmatpush1.xpose.msra.mxu0 0.0
      %560 = vmatprep.subr.mxu0 0.0
      %561 = vmatpush1.xpose.msra.mxu0 0.0
      %562 = vmatprep.subr.mxu0 0.0
      %563 = vmatpush1.xpose.msra.mxu0 0.0
      %564 = vmatprep.subr.mxu0 0.0
      %565 = vmatpush1.xpose.msra.mxu0 0.0
      %566 = vmatprep.subr.mxu0 0.0
      %567 = vmatpush1.xpose.msra.mxu0 0.0
      %568 = vmatprep.subr.mxu0 0.0
      %569 = vmatpush1.xpose.msra.mxu0 0.0
      %570 = vmatprep.subr.mxu0 0.0
      %571 = vmatpush1.xpose.msra.mxu0 0.0
      %572 = vmatprep.subr.mxu0 0.0
      %573 = vmatpush1.xpose.msra.mxu0 0.0
      %574 = vmatprep.subr.mxu0 0.0
      %575 = vmatpush1.xpose.msra.mxu0 0.0
      %576 = vmatprep.subr.mxu0 0.0
      %577 = vmatpush1.xpose.msra.mxu0 0.0
      %578 = vmatprep.subr.mxu0 0.0
      %579 = vmatpush1.xpose.msra.mxu0 0.0
      %580 = vmatprep.subr.mxu0 0.0
      %581 = vmatpush1.xpose.msra.mxu0 0.0
      %582 = vmatprep.subr.mxu0 0.0
      %583 = vmatpush1.xpose.msra.mxu0 0.0
      %584 = vmatprep.subr.mxu0 0.0
      %585 = vmatpush1.xpose.msra.mxu0 0.0
      %586 = vmatprep.subr.mxu0 0.0
      %587 = vmatpush1.xpose.msra.mxu0 0.0
      %588 = vmatprep.subr.mxu0 0.0
      %589 = vmatpush1.xpose.msra.mxu0 0.0
      %590 = vmatprep.subr.mxu0 0.0
      %591 = vmatpush1.xpose.msra.mxu0 0.0
      %592 = vmatprep.subr.mxu0 0.0
      %593 = vmatpush1.xpose.msra.mxu0 0.0
      %594 = vmatprep.subr.mxu0 0.0
      %595 = vmatpush1.xpose.msra.mxu0 0.0
      %596 = vmatprep.subr.mxu0 0.0
      %597 = vmatpush1.xpose.msra.mxu0 0.0
      %598 = vmatprep.subr.mxu0 0.0
      %599 = vmatpush1.xpose.msra.mxu0 0.0
      %600 = vmatprep.subr.mxu0 0.0
      %601 = vmatpush1.xpose.msra.mxu0 0.0
      %602 = vmatprep.subr.mxu0 0.0
      %603 = vmatpush1.xpose.msra.mxu0 0.0
      %604 = vmatprep.subr.mxu0 0.0
      %605 = vmatpush1.xpose.msra.mxu0 0.0
      %606 = vmatprep.subr.mxu0 0.0
      %607 = vmatpush1.xpose.msra.mxu0 0.0
      %608 = vmatprep.subr.mxu0 0.0
      %609 = vmatpush1.xpose.msra.mxu0 0.0
      %610 = vmatprep.subr.mxu0 0.0
      %611 = vmatpush1.xpose.msra.mxu0 0.0
      %612 = vmatprep.subr.mxu0 0.0
      %613 = vmatpush1.xpose.msra.mxu0 0.0
      %614 = vmatprep.subr.mxu0 0.0
      %615 = vmatpush1.xpose.msra.mxu0 0.0
      %616 = vmatprep.subr.mxu0 0.0
      %617 = vmatpush1.xpose.msra.mxu0 0.0
      %618 = vmatprep.mubr.f32.mxu0 0.0
      %619 = vmatmul.mubr.f32.gmra.mrb[0].mxu0 %v549
      %v620 = vpop.f32.mrb[0].mxu0
      %v621 = vadd.f32 %v540, %v620
      %v622 = vpop.f32.mrb[0].mxu0
      %623 = vmatprep.mubr.f32.mxu0 0.0
      %624 = vmatmul.mubr.f32.gmra.mrb[0].mxu0 %v552
      %v625 = vpop.f32.mrb[0].mxu0
      %v626 = vadd.f32 %v545, %v625
      %v627 = vpop.f32.mrb[0].mxu0
      %628 = vdwg.mxu0
      %629 = vmatprep.subr.mxu0 0.0
      %630 = vmatpush1.xpose.msra.mxu0 %v549
      %631 = vmatprep.subr.mxu0 0.0
      %632 = vmatpush1.xpose.msra.mxu0 %v552
      %633 = vmatprep.subr.mxu0 0.0
      %634 = vmatpush1.xpose.msra.mxu0 0.0
      %635 = vmatprep.subr.mxu0 0.0
      %636 = vmatpush1.xpose.msra.mxu0 0.0
      %637 = vmatprep.subr.mxu0 0.0
      %638 = vmatpush1.xpose.msra.mxu0 0.0
      %639 = vmatprep.subr.mxu0 0.0
      %640 = vmatpush1.xpose.msra.mxu0 0.0
      %641 = vmatprep.subr.mxu0 0.0
      %642 = vmatpush1.xpose.msra.mxu0 0.0
      %643 = vmatprep.subr.mxu0 0.0
      %644 = vmatpush1.xpose.msra.mxu0 0.0
      %645 = vmatprep.subr.mxu0 0.0
      %646 = vmatpush1.xpose.msra.mxu0 0.0
      %647 = vmatprep.subr.mxu0 0.0
      %648 = vmatpush1.xpose.msra.mxu0 0.0
      %649 = vmatprep.subr.mxu0 0.0
      %650 = vmatpush1.xpose.msra.mxu0 0.0
      %651 = vmatprep.subr.mxu0 0.0
      %652 = vmatpush1.xpose.msra.mxu0 0.0
      %653 = vmatprep.subr.mxu0 0.0
      %654 = vmatpush1.xpose.msra.mxu0 0.0
      %655 = vmatprep.subr.mxu0 0.0
      %656 = vmatpush1.xpose.msra.mxu0 0.0
      %657 = vmatprep.subr.mxu0 0.0
      %658 = vmatpush1.xpose.msra.mxu0 0.0
      %659 = vmatprep.subr.mxu0 0.0
      %660 = vmatpush1.xpose.msra.mxu0 0.0
      %661 = vmatprep.subr.mxu0 0.0
      %662 = vmatpush1.xpose.msra.mxu0 0.0
      %663 = vmatprep.subr.mxu0 0.0
      %664 = vmatpush1.xpose.msra.mxu0 0.0
      %665 = vmatprep.subr.mxu0 0.0
      %666 = vmatpush1.xpose.msra.mxu0 0.0
      %667 = vmatprep.subr.mxu0 0.0
      %668 = vmatpush1.xpose.msra.mxu0 0.0
      %669 = vmatprep.subr.mxu0 0.0
      %670 = vmatpush1.xpose.msra.mxu0 0.0
      %671 = vmatprep.subr.mxu0 0.0
      %672 = vmatpush1.xpose.msra.mxu0 0.0
      %673 = vmatprep.subr.mxu0 0.0
      %674 = vmatpush1.xpose.msra.mxu0 0.0
      %675 = vmatprep.subr.mxu0 0.0
      %676 = vmatpush1.xpose.msra.mxu0 0.0
      %677 = vmatprep.subr.mxu0 0.0
      %678 = vmatpush1.xpose.msra.mxu0 0.0
      %679 = vmatprep.subr.mxu0 0.0
      %680 = vmatpush1.xpose.msra.mxu0 0.0
      %681 = vmatprep.subr.mxu0 0.0
      %682 = vmatpush1.xpose.msra.mxu0 0.0
      %683 = vmatprep.subr.mxu0 0.0
      %684 = vmatpush1.xpose.msra.mxu0 0.0
      %685 = vmatprep.subr.mxu0 0.0
      %686 = vmatpush1.xpose.msra.mxu0 0.0
      %687 = vmatprep.subr.mxu0 0.0
      %688 = vmatpush1.xpose.msra.mxu0 0.0
      %689 = vmatprep.subr.mxu0 0.0
      %690 = vmatpush1.xpose.msra.mxu0 0.0
      %691 = vmatprep.subr.mxu0 0.0
      %692 = vmatpush1.xpose.msra.mxu0 0.0
      %693 = vmatprep.mubr.f32.mxu0 0.0
      %694 = vmatmul.mubr.f32.gmra.mrb[0].mxu0 %v468
      %v695 = vpop.f32.mrb[0].mxu0
      %v696 = vadd.f32 0.0, %v695
      %v697 = vpop.f32.mrb[0].mxu0
      %698 = vmatprep.mubr.f32.mxu0 0.0
      %699 = vmatmul.mubr.f32.gmra.mrb[0].mxu0 %v471
      %v700 = vpop.f32.mrb[0].mxu0
      %v701 = vadd.f32 0.0, %v700
      %v702 = vpop.f32.mrb[0].mxu0
      %703 = vdwg.mxu0
      %704 = vmatprep.subr.mxu0 0.0
      %705 = vmatpush1.xpose.msra.mxu0 %v468
      %706 = vmatprep.subr.mxu0 0.0
      %707 = vmatpush1.xpose.msra.mxu0 %v471
      %708 = vmatprep.subr.mxu0 0.0
      %709 = vmatpush1.xpose.msra.mxu0 0.0
      %710 = vmatprep.subr.mxu0 0.0
      %711 = vmatpush1.xpose.msra.mxu0 0.0
      %712 = vmatprep.subr.mxu0 0.0
      %713 = vmatpush1.xpose.msra.mxu0 0.0
      %714 = vmatprep.subr.mxu0 0.0
      %715 = vmatpush1.xpose.msra.mxu0 0.0
      %716 = vmatprep.subr.mxu0 0.0
      %717 = vmatpush1.xpose.msra.mxu0 0.0
      %718 = vmatprep.subr.mxu0 0.0
      %719 = vmatpush1.xpose.msra.mxu0 0.0
      %720 = vmatprep.subr.mxu0 0.0
      %721 = vmatpush1.xpose.msra.mxu0 0.0
      %722 = vmatprep.subr.mxu0 0.0
      %723 = vmatpush1.xpose.msra.mxu0 0.0
      %724 = vmatprep.subr.mxu0 0.0
      %725 = vmatpush1.xpose.msra.mxu0 0.0
      %726 = vmatprep.subr.mxu0 0.0
      %727 = vmatpush1.xpose.msra.mxu0 0.0
      %728 = vmatprep.subr.mxu0 0.0
      %729 = vmatpush1.xpose.msra.mxu0 0.0
      %730 = vmatprep.subr.mxu0 0.0
      %731 = vmatpush1.xpose.msra.mxu0 0.0
      %732 = vmatprep.subr.mxu0 0.0
      %733 = vmatpush1.xpose.msra.mxu0 0.0
      %734 = vmatprep.subr.mxu0 0.0
      %735 = vmatpush1.xpose.msra.mxu0 0.0
      %736 = vmatprep.subr.mxu0 0.0
      %737 = vmatpush1.xpose.msra.mxu0 0.0
      %738 = vmatprep.subr.mxu0 0.0
      %739 = vmatpush1.xpose.msra.mxu0 0.0
      %740 = vmatprep.subr.mxu0 0.0
      %741 = vmatpush1.xpose.msra.mxu0 0.0
      %742 = vmatprep.subr.mxu0 0.0
      %743 = vmatpush1.xpose.msra.mxu0 0.0
      %744 = vmatprep.subr.mxu0 0.0
      %745 = vmatpush1.xpose.msra.mxu0 0.0
      %746 = vmatprep.subr.mxu0 0.0
      %747 = vmatpush1.xpose.msra.mxu0 0.0
      %748 = vmatprep.subr.mxu0 0.0
      %749 = vmatpush1.xpose.msra.mxu0 0.0
      %750 = vmatprep.subr.mxu0 0.0
      %751 = vmatpush1.xpose.msra.mxu0 0.0
      %752 = vmatprep.subr.mxu0 0.0
      %753 = vmatpush1.xpose.msra.mxu0 0.0
      %754 = vmatprep.subr.mxu0 0.0
      %755 = vmatpush1.xpose.msra.mxu0 0.0
      %756 = vmatprep.subr.mxu0 0.0
      %757 = vmatpush1.xpose.msra.mxu0 0.0
      %758 = vmatprep.subr.mxu0 0.0
      %759 = vmatpush1.xpose.msra.mxu0 0.0
      %760 = vmatprep.subr.mxu0 0.0
      %761 = vmatpush1.xpose.msra.mxu0 0.0
      %762 = vmatprep.subr.mxu0 0.0
      %763 = vmatpush1.xpose.msra.mxu0 0.0
      %764 = vmatprep.subr.mxu0 0.0
      %765 = vmatpush1.xpose.msra.mxu0 0.0
      %766 = vmatprep.subr.mxu0 0.0
      %767 = vmatpush1.xpose.msra.mxu0 0.0
      %768 = vmatprep.mubr.f32.mxu0 0.0
      %769 = vmatmul.mubr.f32.gmra.mrb[0].mxu0 %v549
      %v770 = vpop.f32.mrb[0].mxu0
      %v771 = vadd.f32 0.0, %v770
      %v772 = vpop.f32.mrb[0].mxu0
      %773 = vmatprep.mubr.f32.mxu0 0.0
      %774 = vmatmul.mubr.f32.gmra.mrb[0].mxu0 %v552
      %v775 = vpop.f32.mrb[0].mxu0
      %v776 = vadd.f32 0.0, %v775
      %v777 = vpop.f32.mrb[0].mxu0
      %778 = vdwg.mxu0
      %v779 = vsub.f32 %v696, %v771
      %v780 = vsub.f32 %v701, %v776
      %v782 = vsel %vm189, %v465, 0
      %v785 = vsel %vm189, %v466, 0
      %787 = vmatprep.subr.mxu0 0.0
      %788 = vmatpush1.xpose.msra.mxu0 %v468
      %789 = vmatprep.subr.mxu0 0.0
      %790 = vmatpush1.xpose.msra.mxu0 %v471
      %791 = vmatprep.subr.mxu0 0.0
      %792 = vmatpush1.xpose.msra.mxu0 0.0
      %793 = vmatprep.subr.mxu0 0.0
      %794 = vmatpush1.xpose.msra.mxu0 0.0
      %795 = vmatprep.subr.mxu0 0.0
      %796 = vmatpush1.xpose.msra.mxu0 0.0
      %797 = vmatprep.subr.mxu0 0.0
      %798 = vmatpush1.xpose.msra.mxu0 0.0
      %799 = vmatprep.subr.mxu0 0.0
      %800 = vmatpush1.xpose.msra.mxu0 0.0
      %801 = vmatprep.subr.mxu0 0.0
      %802 = vmatpush1.xpose.msra.mxu0 0.0
      %803 = vmatprep.subr.mxu0 0.0
      %804 = vmatpush1.xpose.msra.mxu0 0.0
      %805 = vmatprep.subr.mxu0 0.0
      %806 = vmatpush1.xpose.msra.mxu0 0.0
      %807 = vmatprep.subr.mxu0 0.0
      %808 = vmatpush1.xpose.msra.mxu0 0.0
      %809 = vmatprep.subr.mxu0 0.0
      %810 = vmatpush1.xpose.msra.mxu0 0.0
      %811 = vmatprep.subr.mxu0 0.0
      %812 = vmatpush1.xpose.msra.mxu0 0.0
      %813 = vmatprep.subr.mxu0 0.0
      %814 = vmatpush1.xpose.msra.mxu0 0.0
      %815 = vmatprep.subr.mxu0 0.0
      %816 = vmatpush1.xpose.msra.mxu0 0.0
      %817 = vmatprep.subr.mxu0 0.0
      %818 = vmatpush1.xpose.msra.mxu0 0.0
      %819 = vmatprep.subr.mxu0 0.0
      %820 = vmatpush1.xpose.msra.mxu0 0.0
      %821 = vmatprep.subr.mxu0 0.0
      %822 = vmatpush1.xpose.msra.mxu0 0.0
      %823 = vmatprep.subr.mxu0 0.0
      %824 = vmatpush1.xpose.msra.mxu0 0.0
      %825 = vmatprep.subr.mxu0 0.0
      %826 = vmatpush1.xpose.msra.mxu0 0.0
      %827 = vmatprep.subr.mxu0 0.0
      %828 = vmatpush1.xpose.msra.mxu0 0.0
      %829 = vmatprep.subr.mxu0 0.0
      %830 = vmatpush1.xpose.msra.mxu0 0.0
      %831 = vmatprep.subr.mxu0 0.0
      %832 = vmatpush1.xpose.msra.mxu0 0.0
      %833 = vmatprep.subr.mxu0 0.0
      %834 = vmatpush1.xpose.msra.mxu0 0.0
      %835 = vmatprep.subr.mxu0 0.0
      %836 = vmatpush1.xpose.msra.mxu0 0.0
      %837 = vmatprep.subr.mxu0 0.0
      %838 = vmatpush1.xpose.msra.mxu0 0.0
      %839 = vmatprep.subr.mxu0 0.0
      %840 = vmatpush1.xpose.msra.mxu0 0.0
      %841 = vmatprep.subr.mxu0 0.0
      %842 = vmatpush1.xpose.msra.mxu0 0.0
      %843 = vmatprep.subr.mxu0 0.0
      %844 = vmatpush1.xpose.msra.mxu0 0.0
      %845 = vmatprep.subr.mxu0 0.0
      %846 = vmatpush1.xpose.msra.mxu0 0.0
      %847 = vmatprep.subr.mxu0 0.0
      %848 = vmatpush1.xpose.msra.mxu0 0.0
      %849 = vmatprep.subr.mxu0 0.0
      %850 = vmatpush1.xpose.msra.mxu0 0.0
      %851 = vmatprep.mubr.f32.mxu0 0.0
      %852 = vmatmul.mubr.f32.gmra.mrb[0].mxu0 %v782
      %v853 = vpop.f32.mrb[0].mxu0
      %v854 = vadd.f32 0.0, %v853
      %v855 = vpop.f32.mrb[0].mxu0
      %856 = vmatprep.mubr.f32.mxu0 0.0
      %857 = vmatmul.mubr.f32.gmra.mrb[0].mxu0 %v785
      %v858 = vpop.f32.mrb[0].mxu0
      %v859 = vadd.f32 0.0, %v858
      %v860 = vpop.f32.mrb[0].mxu0
      %861 = vdwg.mxu0
      %v863 = vsel %vm189, %v463, 0
      %v866 = vsel %vm189, %v464, 0
      %868 = vmatprep.subr.mxu0 0.0
      %869 = vmatpush1.xpose.msra.mxu0 %v549
      %870 = vmatprep.subr.mxu0 0.0
      %871 = vmatpush1.xpose.msra.mxu0 %v552
      %872 = vmatprep.subr.mxu0 0.0
      %873 = vmatpush1.xpose.msra.mxu0 0.0
      %874 = vmatprep.subr.mxu0 0.0
      %875 = vmatpush1.xpose.msra.mxu0 0.0
      %876 = vmatprep.subr.mxu0 0.0
      %877 = vmatpush1.xpose.msra.mxu0 0.0
      %878 = vmatprep.subr.mxu0 0.0
      %879 = vmatpush1.xpose.msra.mxu0 0.0
      %880 = vmatprep.subr.mxu0 0.0
      %881 = vmatpush1.xpose.msra.mxu0 0.0
      %882 = vmatprep.subr.mxu0 0.0
      %883 = vmatpush1.xpose.msra.mxu0 0.0
      %884 = vmatprep.subr.mxu0 0.0
      %885 = vmatpush1.xpose.msra.mxu0 0.0
      %886 = vmatprep.subr.mxu0 0.0
      %887 = vmatpush1.xpose.msra.mxu0 0.0
      %888 = vmatprep.subr.mxu0 0.0
      %889 = vmatpush1.xpose.msra.mxu0 0.0
      %890 = vmatprep.subr.mxu0 0.0
      %891 = vmatpush1.xpose.msra.mxu0 0.0
      %892 = vmatprep.subr.mxu0 0.0
      %893 = vmatpush1.xpose.msra.mxu0 0.0
      %894 = vmatprep.subr.mxu0 0.0
      %895 = vmatpush1.xpose.msra.mxu0 0.0
      %896 = vmatprep.subr.mxu0 0.0
      %897 = vmatpush1.xpose.msra.mxu0 0.0
      %898 = vmatprep.subr.mxu0 0.0
      %899 = vmatpush1.xpose.msra.mxu0 0.0
      %900 = vmatprep.subr.mxu0 0.0
      %901 = vmatpush1.xpose.msra.mxu0 0.0
      %902 = vmatprep.subr.mxu0 0.0
      %903 = vmatpush1.xpose.msra.mxu0 0.0
      %904 = vmatprep.subr.mxu0 0.0
      %905 = vmatpush1.xpose.msra.mxu0 0.0
      %906 = vmatprep.subr.mxu0 0.0
      %907 = vmatpush1.xpose.msra.mxu0 0.0
      %908 = vmatprep.subr.mxu0 0.0
      %909 = vmatpush1.xpose.msra.mxu0 0.0
      %910 = vmatprep.subr.mxu0 0.0
      %911 = vmatpush1.xpose.msra.mxu0 0.0
      %912 = vmatprep.subr.mxu0 0.0
      %913 = vmatpush1.xpose.msra.mxu0 0.0
      %914 = vmatprep.subr.mxu0 0.0
      %915 = vmatpush1.xpose.msra.mxu0 0.0
      %916 = vmatprep.subr.mxu0 0.0
      %917 = vmatpush1.xpose.msra.mxu0 0.0
      %918 = vmatprep.subr.mxu0 0.0
      %919 = vmatpush1.xpose.msra.mxu0 0.0
      %920 = vmatprep.subr.mxu0 0.0
      %921 = vmatpush1.xpose.msra.mxu0 0.0
      %922 = vmatprep.subr.mxu0 0.0
      %923 = vmatpush1.xpose.msra.mxu0 0.0
      %924 = vmatprep.subr.mxu0 0.0
      %925 = vmatpush1.xpose.msra.mxu0 0.0
      %926 = vmatprep.subr.mxu0 0.0
      %927 = vmatpush1.xpose.msra.mxu0 0.0
      %928 = vmatprep.subr.mxu0 0.0
      %929 = vmatpush1.xpose.msra.mxu0 0.0
      %930 = vmatprep.subr.mxu0 0.0
      %931 = vmatpush1.xpose.msra.mxu0 0.0
      %932 = vmatprep.mubr.f32.mxu0 0.0
      %933 = vmatmul.mubr.f32.gmra.mrb[0].mxu0 %v863
      %v934 = vpop.f32.mrb[0].mxu0
      %v935 = vadd.f32 %v854, %v934
      %v936 = vpop.f32.mrb[0].mxu0
      %937 = vmatprep.mubr.f32.mxu0 0.0
      %938 = vmatmul.mubr.f32.gmra.mrb[0].mxu0 %v866
      %v939 = vpop.f32.mrb[0].mxu0
      %v940 = vadd.f32 %v859, %v939
      %v941 = vpop.f32.mrb[0].mxu0
      %942 = vdwg.mxu0
      %943 = vmatprep.subr.mxu0 0.0
      %944 = vmatpush1.xpose.msra.mxu0 %v549
      %945 = vmatprep.subr.mxu0 0.0
      %946 = vmatpush1.xpose.msra.mxu0 %v552
      %947 = vmatprep.subr.mxu0 0.0
      %948 = vmatpush1.xpose.msra.mxu0 0.0
      %949 = vmatprep.subr.mxu0 0.0
      %950 = vmatpush1.xpose.msra.mxu0 0.0
      %951 = vmatprep.subr.mxu0 0.0
      %952 = vmatpush1.xpose.msra.mxu0 0.0
      %953 = vmatprep.subr.mxu0 0.0
      %954 = vmatpush1.xpose.msra.mxu0 0.0
      %955 = vmatprep.subr.mxu0 0.0
      %956 = vmatpush1.xpose.msra.mxu0 0.0
      %957 = vmatprep.subr.mxu0 0.0
      %958 = vmatpush1.xpose.msra.mxu0 0.0
      %959 = vmatprep.subr.mxu0 0.0
      %960 = vmatpush1.xpose.msra.mxu0 0.0
      %961 = vmatprep.subr.mxu0 0.0
      %962 = vmatpush1.xpose.msra.mxu0 0.0
      %963 = vmatprep.subr.mxu0 0.0
      %964 = vmatpush1.xpose.msra.mxu0 0.0
      %965 = vmatprep.subr.mxu0 0.0
      %966 = vmatpush1.xpose.msra.mxu0 0.0
      %967 = vmatprep.subr.mxu0 0.0
      %968 = vmatpush1.xpose.msra.mxu0 0.0
      %969 = vmatprep.subr.mxu0 0.0
      %970 = vmatpush1.xpose.msra.mxu0 0.0
      %971 = vmatprep.subr.mxu0 0.0
      %972 = vmatpush1.xpose.msra.mxu0 0.0
      %973 = vmatprep.subr.mxu0 0.0
      %974 = vmatpush1.xpose.msra.mxu0 0.0
      %975 = vmatprep.subr.mxu0 0.0
      %976 = vmatpush1.xpose.msra.mxu0 0.0
      %977 = vmatprep.subr.mxu0 0.0
      %978 = vmatpush1.xpose.msra.mxu0 0.0
      %979 = vmatprep.subr.mxu0 0.0
      %980 = vmatpush1.xpose.msra.mxu0 0.0
      %981 = vmatprep.subr.mxu0 0.0
      %982 = vmatpush1.xpose.msra.mxu0 0.0
      %983 = vmatprep.subr.mxu0 0.0
      %984 = vmatpush1.xpose.msra.mxu0 0.0
      %985 = vmatprep.subr.mxu0 0.0
      %986 = vmatpush1.xpose.msra.mxu0 0.0
      %987 = vmatprep.subr.mxu0 0.0
      %988 = vmatpush1.xpose.msra.mxu0 0.0
      %989 = vmatprep.subr.mxu0 0.0
      %990 = vmatpush1.xpose.msra.mxu0 0.0
      %991 = vmatprep.subr.mxu0 0.0
      %992 = vmatpush1.xpose.msra.mxu0 0.0
      %993 = vmatprep.subr.mxu0 0.0
      %994 = vmatpush1.xpose.msra.mxu0 0.0
      %995 = vmatprep.subr.mxu0 0.0
      %996 = vmatpush1.xpose.msra.mxu0 0.0
      %997 = vmatprep.subr.mxu0 0.0
      %998 = vmatpush1.xpose.msra.mxu0 0.0
      %999 = vmatprep.subr.mxu0 0.0
      %1000 = vmatpush1.xpose.msra.mxu0 0.0
      %1001 = vmatprep.subr.mxu0 0.0
      %1002 = vmatpush1.xpose.msra.mxu0 0.0
      %1003 = vmatprep.subr.mxu0 0.0
      %1004 = vmatpush1.xpose.msra.mxu0 0.0
      %1005 = vmatprep.subr.mxu0 0.0
      %1006 = vmatpush1.xpose.msra.mxu0 0.0
      %1007 = vmatprep.mubr.f32.mxu0 0.0
      %1008 = vmatmul.mubr.f32.gmra.mrb[0].mxu0 %v782
      %v1009 = vpop.f32.mrb[0].mxu0
      %v1010 = vadd.f32 0.0, %v1009
      %v1011 = vpop.f32.mrb[0].mxu0
      %1012 = vmatprep.mubr.f32.mxu0 0.0
      %1013 = vmatmul.mubr.f32.gmra.mrb[0].mxu0 %v785
      %v1014 = vpop.f32.mrb[0].mxu0
      %v1015 = vadd.f32 0.0, %v1014
      %v1016 = vpop.f32.mrb[0].mxu0
      %1017 = vdwg.mxu0
      %1018 = vmatprep.subr.mxu0 0.0
      %1019 = vmatpush1.xpose.msra.mxu0 %v468
      %1020 = vmatprep.subr.mxu0 0.0
      %1021 = vmatpush1.xpose.msra.mxu0 %v471
      %1022 = vmatprep.subr.mxu0 0.0
      %1023 = vmatpush1.xpose.msra.mxu0 0.0
      %1024 = vmatprep.subr.mxu0 0.0
      %1025 = vmatpush1.xpose.msra.mxu0 0.0
      %1026 = vmatprep.subr.mxu0 0.0
      %1027 = vmatpush1.xpose.msra.mxu0 0.0
      %1028 = vmatprep.subr.mxu0 0.0
      %1029 = vmatpush1.xpose.msra.mxu0 0.0
      %1030 = vmatprep.subr.mxu0 0.0
      %1031 = vmatpush1.xpose.msra.mxu0 0.0
      %1032 = vmatprep.subr.mxu0 0.0
      %1033 = vmatpush1.xpose.msra.mxu0 0.0
      %1034 = vmatprep.subr.mxu0 0.0
      %1035 = vmatpush1.xpose.msra.mxu0 0.0
      %1036 = vmatprep.subr.mxu0 0.0
      %1037 = vmatpush1.xpose.msra.mxu0 0.0
      %1038 = vmatprep.subr.mxu0 0.0
      %1039 = vmatpush1.xpose.msra.mxu0 0.0
      %1040 = vmatprep.subr.mxu0 0.0
      %1041 = vmatpush1.xpose.msra.mxu0 0.0
      %1042 = vmatprep.subr.mxu0 0.0
      %1043 = vmatpush1.xpose.msra.mxu0 0.0
      %1044 = vmatprep.subr.mxu0 0.0
      %1045 = vmatpush1.xpose.msra.mxu0 0.0
      %1046 = vmatprep.subr.mxu0 0.0
      %1047 = vmatpush1.xpose.msra.mxu0 0.0
      %1048 = vmatprep.subr.mxu0 0.0
      %1049 = vmatpush1.xpose.msra.mxu0 0.0
      %1050 = vmatprep.subr.mxu0 0.0
      %1051 = vmatpush1.xpose.msra.mxu0 0.0
      %1052 = vmatprep.subr.mxu0 0.0
      %1053 = vmatpush1.xpose.msra.mxu0 0.0
      %1054 = vmatprep.subr.mxu0 0.0
      %1055 = vmatpush1.xpose.msra.mxu0 0.0
      %1056 = vmatprep.subr.mxu0 0.0
      %1057 = vmatpush1.xpose.msra.mxu0 0.0
      %1058 = vmatprep.subr.mxu0 0.0
      %1059 = vmatpush1.xpose.msra.mxu0 0.0
      %1060 = vmatprep.subr.mxu0 0.0
      %1061 = vmatpush1.xpose.msra.mxu0 0.0
      %1062 = vmatprep.subr.mxu0 0.0
      %1063 = vmatpush1.xpose.msra.mxu0 0.0
      %1064 = vmatprep.subr.mxu0 0.0
      %1065 = vmatpush1.xpose.msra.mxu0 0.0
      %1066 = vmatprep.subr.mxu0 0.0
      %1067 = vmatpush1.xpose.msra.mxu0 0.0
      %1068 = vmatprep.subr.mxu0 0.0
      %1069 = vmatpush1.xpose.msra.mxu0 0.0
      %1070 = vmatprep.subr.mxu0 0.0
      %1071 = vmatpush1.xpose.msra.mxu0 0.0
      %1072 = vmatprep.subr.mxu0 0.0
      %1073 = vmatpush1.xpose.msra.mxu0 0.0
      %1074 = vmatprep.subr.mxu0 0.0
      %1075 = vmatpush1.xpose.msra.mxu0 0.0
      %1076 = vmatprep.subr.mxu0 0.0
      %1077 = vmatpush1.xpose.msra.mxu0 0.0
      %1078 = vmatprep.subr.mxu0 0.0
      %1079 = vmatpush1.xpose.msra.mxu0 0.0
      %1080 = vmatprep.subr.mxu0 0.0
      %1081 = vmatpush1.xpose.msra.mxu0 0.0
      %1082 = vmatprep.mubr.f32.mxu0 0.0
      %1083 = vmatmul.mubr.f32.gmra.mrb[0].mxu0 %v863
      %v1084 = vpop.f32.mrb[0].mxu0
      %v1085 = vadd.f32 0.0, %v1084
      %v1086 = vpop.f32.mrb[0].mxu0
      %1087 = vmatprep.mubr.f32.mxu0 0.0
      %1088 = vmatmul.mubr.f32.gmra.mrb[0].mxu0 %v866
      %v1089 = vpop.f32.mrb[0].mxu0
      %v1090 = vadd.f32 0.0, %v1089
      %v1091 = vpop.f32.mrb[0].mxu0
      %1092 = vdwg.mxu0
      %v1093 = vsub.f32 %v1010, %v1085
      %v1094 = vsub.f32 %v1015, %v1090
      %1097 = vrot.lane.b32.xlu0 %v779, 16
      %v1098 = vpop.permute.xlu0 %1097
      %1099 = vrot.lane.b32.xlu0 %v780, 16
      %v1100 = vpop.permute.xlu0 %1099
      %1105 = vrot.lane.b32.xlu0 %v935, 32
      %v1106 = vpop.permute.xlu0 %1105
      %1107 = vrot.lane.b32.xlu0 %v940, 32
      %v1108 = vpop.permute.xlu0 %1107
      %1113 = vrot.lane.b32.xlu0 %v1093, 48
      %v1114 = vpop.permute.xlu0 %1113
      %1115 = vrot.lane.b32.xlu0 %v1094, 48
      %v1116 = vpop.permute.xlu0 %1115
      %vm1119 = vcmask 130048
      %v1120 = vsel %vm1119, %v621, %v1098
      %v1121 = vsel %vm1119, %v626, %v1100
      %v1122 = vsel %vm189, %v1120, %v1106
      %v1123 = vsel %vm189, %v1121, %v1108
      %vm1124 = vcmask 392192
      %v1125 = vsel %vm1124, %v1122, %v1114
      %v1126 = vsel %vm1124, %v1123, %v1116
      %vm1127 = vcmask 523264
      %v1128 = vsel %vm1127, %v1125, 0.0
      %v1129 = vsel %vm1127, %v1126, 0.0
      %1130 = vst [vmem:[#allocation3] sm:$0xff] %v1128
      %1131 = vst [vmem:[#allocation3 + $0x8] sm:$0xff] %v1129
    $region33: #{tpu_custom_call.1} parent=1 // pred_fallthru
      _
    // Predicated region
    $region34: #{tpu_custom_call.1} parent=1 // pred_check
      _
    $region35: #{tpu_custom_call.1} parent=1 // pred_check_branch
      %1133 = sbr.rel (0) target = $region37
    $region36: #{tpu_custom_call.1} parent=1 // pred_region
      %s1135 = ssub.s32 256, 256
      %1136 = vsyncadd [#allocation4], %s1135
      %s1137 = sshll.u32 [#allocation3], 4
      %s1138 = int_to_ptr.vmem [resolvable:$true] %s1137
      %1143 = dma.vmem_to_hbm [thread:$0]  %s1138, 256, %s6, [#allocation4], 128, 128, 8
    $region37: #{tpu_custom_call.1} parent=1 // pred_fallthru
      _
    // Predicated region
    $region38: #{tpu_custom_call.1} parent=1 // pred_check
      _
    $region39: #{tpu_custom_call.1} parent=1 // pred_check_branch
      %1145 = sbr.rel (0) target = $region41
    $region40: #{tpu_custom_call.1} parent=1 // pred_region
      %1146 = dma.done [#allocation4], 256
    $region41: #{tpu_custom_call.1} parent=1 // pred_fallthru
      _
    %1147 = vsyncpa [#allocation4], 1

</llo_original>
